<compile_context>
chip_gen: v7x
topology: tpu7x:2x2x1
jax: 0.10.0
libtpu: 0.0.40
codegen_flags: <defaults>
</compile_context>

<pallas_src>
import math

import jax
import jax.numpy as jnp
import numpy as np
from jax.experimental import pallas as pl
from jax.experimental.pallas import tpu as pltpu


_EPS = float(np.finfo(np.float32).eps)                 # torch clamp_probs eps (f32)
_MAX_LOGIT = float(math.log((1.0 - _EPS) / _EPS))      # logit(1-eps) ~ 15.94


def _softplus(x):
    # Stable softplus using only exp/log/abs/max.
    return jnp.maximum(x, 0.0) + jnp.log(1.0 + jnp.exp(-jnp.abs(x)))


# ---------------------------------------------------------------------------
# Kernel
# ---------------------------------------------------------------------------
def concmsd_kernel(x_ref, u_ref, Wiv_ref, Wh_ref, bh_ref, Wfc_ref, Whead_ref,
                   bmisc_ref, out_ref):
    f32 = jnp.float32
    LB = x_ref.shape[0]
    B, NT = u_ref.shape
    L = LB // B
    HP, G3 = Wh_ref.shape          # padded hidden width (128), 3 * gate block
    G = G3 // 3                    # 128-lane gate block

    # ---- Encoder input path: ONE fused matmul for all timesteps.
    # Embedding + input-gate weights + input bias are all folded into Wiv in
    # the wrapper (the trailing ones column of x carries the bias row).
    gi_all = jnp.dot(x_ref[...], Wiv_ref[...],
                     preferred_element_type=f32)                     # (L*B, 3G)

    Wh = Wh_ref[...]                                  # (HP, 3G), gate-padded
    bh = jnp.broadcast_to(bh_ref[...], (B, G3))       # hoisted broadcast

    # ---- GRU recurrence, fully unrolled (L is small & static).  All gate
    # slices are 128-lane tile-aligned -> no cross-lane shuffles on the only
    # serial chain.  Padded lanes of h provably stay zero.
    h = jnp.zeros((B, HP), f32)
    for t in range(L):
        gi = gi_all[t * B:(t + 1) * B, :]                            # (B, 3G)
        gh = jnp.dot(h, Wh, preferred_element_type=f32) + bh         # (B, 3G)
        g = gi + gh
        rz = jax.nn.sigmoid(g[:, :2 * G])             # fused r|z sigmoid push
        r = rz[:, :G]
        z = rz[:, G:]
        n = jnp.tanh(gi[:, 2 * G:] + r * gh[:, 2 * G:])
        h = (1.0 - z) * n + z * h

    # ---- ConcMSD head: fc + relu, then ONE fused (probs | temp) projection.
    logits = jnp.maximum(
        jnp.dot(h, Wfc_ref[...], preferred_element_type=f32)
        + bmisc_ref[:, :HP], 0.0)                                    # (B, HP)
    # TODO(synk): use_made=True path (logits @ tril(ones)) not implemented.
    head = (jnp.dot(logits, Whead_ref[...], preferred_element_type=f32)
            + bmisc_ref[:, HP:])                                     # (B, 2G)
    p_logit = head[:, :NT]
    t_logit = head[:, G:G + NT]

    probs = jax.nn.sigmoid(p_logit)
    temp = 0.01 + _softplus(t_logit)

    # LogitRelaxedBernoulli(temp, probs).rsample(), then sigmoid(exp(.)).
    # Reuse p_logit as log(p) - log(1-p); clamp preserves clamp_probs.
    lo = jnp.clip(p_logit, -_MAX_LOGIT, _MAX_LOGIT)
    u_c = jnp.clip(u_ref[...], _EPS, 1.0 - _EPS)
    s_logit = (jnp.log(u_c) - jnp.log(1.0 - u_c) + lo) / temp
    sample = jax.nn.sigmoid(jnp.exp(s_logit))

    # Single packed output -> one writeback DMA.
    out_ref[0, :, :] = sample
    out_ref[1, :, :] = probs
    out_ref[2, :, :] = temp


# ---------------------------------------------------------------------------
# Wrapper-side weight plumbing (layout only; numerically exact)
# ---------------------------------------------------------------------------
_G = 128   # lane block per GRU gate
_HP = 128  # padded hidden width


def _build_input_weight(emb, Wi3, bi3):
    """emb:(V,E), Wi3:(3,E,H), bi3:(3,1,H) -> (V+1, 3G): emb@Wi per gate,
    gate-padded to 128 lanes, input bias folded in as the last row."""
    V = emb.shape[0]
    H = Wi3.shape[-1]
    out = jnp.zeros((V + 1, 3 * _G), jnp.float32)
    for g in range(3):
        out = out.at[:V, g * _G:g * _G + H].set(emb @ Wi3[g])
        out = out.at[V, g * _G:g * _G + H].set(bi3[g][0])
    return out


def _build_hidden_weight(Wh3):
    """(3,H,H) -> (HP, 3G), gate- and row-padded with zeros."""
    H = Wh3.shape[-1]
    out = jnp.zeros((_HP, 3 * _G), jnp.float32)
    for g in range(3):
        out = out.at[:H, g * _G:g * _G + H].set(Wh3[g])
    return out


def _build_hidden_bias(bh3):
    """(3,1,H) -> (1, 3G), gate-padded."""
    H = bh3.shape[-1]
    out = jnp.zeros((1, 3 * _G), jnp.float32)
    for g in range(3):
        out = out.at[0, g * _G:g * _G + H].set(bh3[g][0])
    return out


def concmsd_forward(x_t, u_noise, params):
    """x_t: (L, B) int32 char ids (sequence-major); u_noise: (B, num_tags)
    uniform(0,1) noise for the relaxed-Bernoulli rsample.
    Returns (sample, probs, temp)."""
    L, B = x_t.shape
    V = params["emb_src"].shape[0]
    H = params["We_h"].shape[-1]
    DH = params["W_fc"].shape[-1]
    NT = params["W_probs"].shape[-1]
    f32 = jnp.float32

    # One-hot ids + trailing ones column (carries the folded input bias).
    x_oh = jax.nn.one_hot(x_t.reshape(-1), V, dtype=f32)            # (L*B, V)
    x_aug = jnp.concatenate([x_oh, jnp.ones((L * B, 1), f32)], axis=1)

    # Fused / padded weights (pure layout plumbing, numerically exact).
    Wiv = _build_input_weight(params["emb_src"], params["We_i"], params["be_i"])
    Wh_pad = _build_hidden_weight(params["We_h"])
    bh_pad = _build_hidden_bias(params["be_h"])

    Wfc_pad = jnp.zeros((_HP, _HP), f32).at[:H, :DH].set(params["W_fc"])
    Whead = jnp.zeros((_HP, 2 * _G), f32)
    Whead = Whead.at[:DH, :NT].set(params["W_probs"])
    Whead = Whead.at[:DH, _G:_G + NT].set(params["W_temp"])

    bmisc = jnp.zeros((1, _HP + 2 * _G), f32)
    bmisc = bmisc.at[0, :DH].set(params["b_fc"][0])
    bmisc = bmisc.at[0, _HP:_HP + NT].set(params["b_probs"][0])
    bmisc = bmisc.at[0, _HP + _G:_HP + _G + NT].set(params["b_temp"][0])

    args = (x_aug, u_noise.astype(f32), Wiv, Wh_pad, bh_pad,
            Wfc_pad, Whead, bmisc)

    vmem = pl.BlockSpec(memory_space=pltpu.MemorySpace.VMEM)
    out = pl.pallas_call(
        concmsd_kernel,
        out_shape=jax.ShapeDtypeStruct((3, B, NT), f32),
        in_specs=[vmem] * len(args),
        out_specs=vmem,
    )(*args)
    return out[0], out[1], out[2]


# ---------------------------------------------------------------------------
# Pure-JAX reference (unfused PyTorch-style GRU + ConcMSD head)
# ---------------------------------------------------------------------------
def _gru_step_ref(x, h, Wi, Wh, bi, bh):
    gi_r = x @ Wi[0] + bi[0]
    gi_z = x @ Wi[1] + bi[1]
    gi_n = x @ Wi[2] + bi[2]
    gh_r = h @ Wh[0] + bh[0]
    gh_z = h @ Wh[1] + bh[1]
    gh_n = h @ Wh[2] + bh[2]
    r = jax.nn.sigmoid(gi_r + gh_r)
    z = jax.nn.sigmoid(gi_z + gh_z)
    n = jnp.tanh(gi_n + r * gh_n)
    return (1.0 - z) * n + z * h


def concmsd_reference(x_t, u_noise, params):
    L, B = x_t.shape
    V = params["emb_src"].shape[0]
    H = params["We_h"].shape[-1]
    f32 = jnp.float32
    x_oh = jax.nn.one_hot(x_t, V, dtype=f32)
    h = jnp.zeros((B, H), f32)
    for t in range(L):
        x_emb = x_oh[t] @ params["emb_src"]
        h = _gru_step_ref(x_emb, h, params["We_i"], params["We_h"],
                          params["be_i"], params["be_h"])
    logits = jnp.maximum(h @ params["W_fc"] + params["b_fc"], 0.0)
    probs = jax.nn.sigmoid(logits @ params["W_probs"] + params["b_probs"])
    temp = 0.01 + _softplus(logits @ params["W_temp"] + params["b_temp"])
    p_c = jnp.clip(probs, _EPS, 1.0 - _EPS)
    u_c = jnp.clip(u_noise, _EPS, 1.0 - _EPS)
    s_logit = (jnp.log(u_c) - jnp.log(1.0 - u_c)
               + jnp.log(p_c) - jnp.log(1.0 - p_c)) / temp
    return jax.nn.sigmoid(jnp.exp(s_logit)), probs, temp


def init_params(key, vocab_size=16, emb=16, hidden=32, h_dim=32, num_tags=16):
    ks = jax.random.split(key, 11)

    def w(k, shape, scale=0.1):
        return (scale * jax.random.normal(k, shape)).astype(jnp.float32)

    return {
        # encoder (GRU char-encoder)
        "emb_src": w(ks[0], (vocab_size, emb)),
        "We_i": w(ks[1], (3, emb, hidden)),
        "We_h": w(ks[2], (3, hidden, hidden)),
        "be_i": w(ks[3], (3, 1, hidden)),
        "be_h": w(ks[4], (3, 1, hidden)),
        # ConcMSD head
        "W_fc": w(ks[5], (hidden, h_dim)),        # fc: Linear(input_dim, h_dim)
        "b_fc": w(ks[6], (1, h_dim)),
        "W_probs": w(ks[7], (h_dim, num_tags)),   # probsi
        "b_probs": w(ks[8], (1, num_tags)),
        "W_temp": w(ks[9], (h_dim, num_tags)),    # tempi
        "b_temp": w(ks[10], (1, num_tags)),
    }


if __name__ == "__main__":
    key = jax.random.PRNGKey(0)
    k_par, k_x, k_u = jax.random.split(key, 3)

    L, B = 8, 8          # seq length, batch
    V, E = 16, 16        # vocab size, char-embedding dim
    H = 32               # encoder hidden size == ConcMSD input_dim
    DH = 32              # ConcMSD h_dim
    NT = 16              # num_tags

    params = init_params(k_par, vocab_size=V, emb=E, hidden=H, h_dim=DH,
                         num_tags=NT)
    x_t = jax.random.randint(k_x, (L, B), 0, V, dtype=jnp.int32)
    # uniform noise for the LogitRelaxedBernoulli reparameterized sample
    u_noise = jax.random.uniform(k_u, (B, NT), dtype=jnp.float32)

    sample, probs, temp = jax.block_until_ready(
        concmsd_forward(x_t, u_noise, params))

    ref_s, ref_p, ref_t = concmsd_reference(x_t, u_noise, params)
    assert np.allclose(np.asarray(sample), np.asarray(ref_s), atol=2e-3, rtol=2e-3)
    assert np.allclose(np.asarray(probs), np.asarray(ref_p), atol=2e-3, rtol=2e-3)
    assert np.allclose(np.asarray(temp), np.asarray(ref_t), atol=2e-3, rtol=2e-3)

    print("KERNEL_OK")
</pallas_src>

<mosaic_0001>
module attributes {stable_mosaic.version = 11 : i64} {
  func.func @concmsd_kernel(%arg0: memref<64x17xf32, #tpu.memory_space<vmem>>, %arg1: memref<8x16xf32, #tpu.memory_space<vmem>>, %arg2: memref<17x384xf32, #tpu.memory_space<vmem>>, %arg3: memref<128x384xf32, #tpu.memory_space<vmem>>, %arg4: memref<1x384xf32, #tpu.memory_space<vmem>>, %arg5: memref<128x128xf32, #tpu.memory_space<vmem>>, %arg6: memref<128x256xf32, #tpu.memory_space<vmem>>, %arg7: memref<1x384xf32, #tpu.memory_space<vmem>>, %arg8: memref<3x8x16xf32, #tpu.memory_space<vmem>>) attributes {dimension_semantics = [], scalar_prefetch = 0 : i64, scratch_operands = 0 : i64, tpu.core_type = #tpu.core_type<tc>} {
    %c0 = arith.constant 0 : index
    %c0_0 = arith.constant 0 : index
    %0 = vector.load %arg0[%c0, %c0_0] : memref<64x17xf32, #tpu.memory_space<vmem>>, vector<64x17xf32>
    %c0_1 = arith.constant 0 : index
    %c0_2 = arith.constant 0 : index
    %1 = vector.load %arg2[%c0_1, %c0_2] : memref<17x384xf32, #tpu.memory_space<vmem>>, vector<17x384xf32>
    %cst = arith.constant dense<0.000000e+00> : vector<64x384xf32>
    %2 = tpu.matmul %0, %1, %cst {dimension_numbers = #tpu.dot_dimension_numbers<[1], [0], [0], [1], [0, 0, 1, 1], [], []>} : vector<64x17xf32>, vector<17x384xf32>, vector<64x384xf32> -> vector<64x384xf32>
    %c0_3 = arith.constant 0 : index
    %c0_4 = arith.constant 0 : index
    %3 = vector.load %arg3[%c0_3, %c0_4] : memref<128x384xf32, #tpu.memory_space<vmem>>, vector<128x384xf32>
    %c0_5 = arith.constant 0 : index
    %c0_6 = arith.constant 0 : index
    %4 = vector.load %arg4[%c0_5, %c0_6] : memref<1x384xf32, #tpu.memory_space<vmem>>, vector<1x384xf32>
    %5 = vector.shape_cast %4 : vector<1x384xf32> to vector<1x384xf32>
    %6 = vector.broadcast %5 : vector<1x384xf32> to vector<8x384xf32>
    %cst_7 = arith.constant 0.000000e+00 : f32
    %7 = vector.broadcast %cst_7 : f32 to vector<8x128xf32>
    %8 = vector.extract_strided_slice %2 {offsets = [0, 0], sizes = [8, 384], strides = [1, 1]} : vector<64x384xf32> to vector<8x384xf32>
    %cst_8 = arith.constant dense<0.000000e+00> : vector<8x384xf32>
    %9 = tpu.matmul %7, %3, %cst_8 {dimension_numbers = #tpu.dot_dimension_numbers<[1], [0], [0], [1], [0, 0, 1, 1], [], []>} : vector<8x128xf32>, vector<128x384xf32>, vector<8x384xf32> -> vector<8x384xf32>
    %10 = arith.addf %9, %6 : vector<8x384xf32>
    %11 = arith.addf %8, %10 : vector<8x384xf32>
    %12 = vector.extract_strided_slice %11 {offsets = [0, 0], sizes = [8, 256], strides = [1, 1]} : vector<8x384xf32> to vector<8x256xf32>
    %13 = arith.negf %12 : vector<8x256xf32>
    %14 = math.exp %13 : vector<8x256xf32>
    %cst_9 = arith.constant 1.000000e+00 : f32
    %15 = vector.broadcast %cst_9 : f32 to vector<8x256xf32>
    %16 = arith.addf %15, %14 : vector<8x256xf32>
    %17 = arith.divf %15, %16 : vector<8x256xf32>
    %18 = vector.extract_strided_slice %17 {offsets = [0, 0], sizes = [8, 128], strides = [1, 1]} : vector<8x256xf32> to vector<8x128xf32>
    %19 = vector.extract_strided_slice %17 {offsets = [0, 128], sizes = [8, 128], strides = [1, 1]} : vector<8x256xf32> to vector<8x128xf32>
    %20 = vector.extract_strided_slice %8 {offsets = [0, 256], sizes = [8, 128], strides = [1, 1]} : vector<8x384xf32> to vector<8x128xf32>
    %21 = vector.extract_strided_slice %10 {offsets = [0, 256], sizes = [8, 128], strides = [1, 1]} : vector<8x384xf32> to vector<8x128xf32>
    %22 = arith.mulf %18, %21 : vector<8x128xf32>
    %23 = arith.addf %20, %22 : vector<8x128xf32>
    %24 = math.tanh %23 : vector<8x128xf32>
    %cst_10 = arith.constant 1.000000e+00 : f32
    %25 = vector.broadcast %cst_10 : f32 to vector<8x128xf32>
    %26 = arith.subf %25, %19 : vector<8x128xf32>
    %27 = arith.mulf %26, %24 : vector<8x128xf32>
    %28 = arith.mulf %19, %7 : vector<8x128xf32>
    %29 = arith.addf %27, %28 : vector<8x128xf32>
    %30 = vector.extract_strided_slice %2 {offsets = [8, 0], sizes = [8, 384], strides = [1, 1]} : vector<64x384xf32> to vector<8x384xf32>
    %cst_11 = arith.constant dense<0.000000e+00> : vector<8x384xf32>
    %31 = tpu.matmul %29, %3, %cst_11 {dimension_numbers = #tpu.dot_dimension_numbers<[1], [0], [0], [1], [0, 0, 1, 1], [], []>} : vector<8x128xf32>, vector<128x384xf32>, vector<8x384xf32> -> vector<8x384xf32>
    %32 = arith.addf %31, %6 : vector<8x384xf32>
    %33 = arith.addf %30, %32 : vector<8x384xf32>
    %34 = vector.extract_strided_slice %33 {offsets = [0, 0], sizes = [8, 256], strides = [1, 1]} : vector<8x384xf32> to vector<8x256xf32>
    %35 = arith.negf %34 : vector<8x256xf32>
    %36 = math.exp %35 : vector<8x256xf32>
    %cst_12 = arith.constant 1.000000e+00 : f32
    %37 = vector.broadcast %cst_12 : f32 to vector<8x256xf32>
    %38 = arith.addf %37, %36 : vector<8x256xf32>
    %39 = arith.divf %37, %38 : vector<8x256xf32>
    %40 = vector.extract_strided_slice %39 {offsets = [0, 0], sizes = [8, 128], strides = [1, 1]} : vector<8x256xf32> to vector<8x128xf32>
    %41 = vector.extract_strided_slice %39 {offsets = [0, 128], sizes = [8, 128], strides = [1, 1]} : vector<8x256xf32> to vector<8x128xf32>
    %42 = vector.extract_strided_slice %30 {offsets = [0, 256], sizes = [8, 128], strides = [1, 1]} : vector<8x384xf32> to vector<8x128xf32>
    %43 = vector.extract_strided_slice %32 {offsets = [0, 256], sizes = [8, 128], strides = [1, 1]} : vector<8x384xf32> to vector<8x128xf32>
    %44 = arith.mulf %40, %43 : vector<8x128xf32>
    %45 = arith.addf %42, %44 : vector<8x128xf32>
    %46 = math.tanh %45 : vector<8x128xf32>
    %cst_13 = arith.constant 1.000000e+00 : f32
    %47 = vector.broadcast %cst_13 : f32 to vector<8x128xf32>
    %48 = arith.subf %47, %41 : vector<8x128xf32>
    %49 = arith.mulf %48, %46 : vector<8x128xf32>
    %50 = arith.mulf %41, %29 : vector<8x128xf32>
    %51 = arith.addf %49, %50 : vector<8x128xf32>
    %52 = vector.extract_strided_slice %2 {offsets = [16, 0], sizes = [8, 384], strides = [1, 1]} : vector<64x384xf32> to vector<8x384xf32>
    %cst_14 = arith.constant dense<0.000000e+00> : vector<8x384xf32>
    %53 = tpu.matmul %51, %3, %cst_14 {dimension_numbers = #tpu.dot_dimension_numbers<[1], [0], [0], [1], [0, 0, 1, 1], [], []>} : vector<8x128xf32>, vector<128x384xf32>, vector<8x384xf32> -> vector<8x384xf32>
    %54 = arith.addf %53, %6 : vector<8x384xf32>
    %55 = arith.addf %52, %54 : vector<8x384xf32>
    %56 = vector.extract_strided_slice %55 {offsets = [0, 0], sizes = [8, 256], strides = [1, 1]} : vector<8x384xf32> to vector<8x256xf32>
    %57 = arith.negf %56 : vector<8x256xf32>
    %58 = math.exp %57 : vector<8x256xf32>
    %cst_15 = arith.constant 1.000000e+00 : f32
    %59 = vector.broadcast %cst_15 : f32 to vector<8x256xf32>
    %60 = arith.addf %59, %58 : vector<8x256xf32>
    %61 = arith.divf %59, %60 : vector<8x256xf32>
    %62 = vector.extract_strided_slice %61 {offsets = [0, 0], sizes = [8, 128], strides = [1, 1]} : vector<8x256xf32> to vector<8x128xf32>
    %63 = vector.extract_strided_slice %61 {offsets = [0, 128], sizes = [8, 128], strides = [1, 1]} : vector<8x256xf32> to vector<8x128xf32>
    %64 = vector.extract_strided_slice %52 {offsets = [0, 256], sizes = [8, 128], strides = [1, 1]} : vector<8x384xf32> to vector<8x128xf32>
    %65 = vector.extract_strided_slice %54 {offsets = [0, 256], sizes = [8, 128], strides = [1, 1]} : vector<8x384xf32> to vector<8x128xf32>
    %66 = arith.mulf %62, %65 : vector<8x128xf32>
    %67 = arith.addf %64, %66 : vector<8x128xf32>
    %68 = math.tanh %67 : vector<8x128xf32>
    %cst_16 = arith.constant 1.000000e+00 : f32
    %69 = vector.broadcast %cst_16 : f32 to vector<8x128xf32>
    %70 = arith.subf %69, %63 : vector<8x128xf32>
    %71 = arith.mulf %70, %68 : vector<8x128xf32>
    %72 = arith.mulf %63, %51 : vector<8x128xf32>
    %73 = arith.addf %71, %72 : vector<8x128xf32>
    %74 = vector.extract_strided_slice %2 {offsets = [24, 0], sizes = [8, 384], strides = [1, 1]} : vector<64x384xf32> to vector<8x384xf32>
    %cst_17 = arith.constant dense<0.000000e+00> : vector<8x384xf32>
    %75 = tpu.matmul %73, %3, %cst_17 {dimension_numbers = #tpu.dot_dimension_numbers<[1], [0], [0], [1], [0, 0, 1, 1], [], []>} : vector<8x128xf32>, vector<128x384xf32>, vector<8x384xf32> -> vector<8x384xf32>
    %76 = arith.addf %75, %6 : vector<8x384xf32>
    %77 = arith.addf %74, %76 : vector<8x384xf32>
    %78 = vector.extract_strided_slice %77 {offsets = [0, 0], sizes = [8, 256], strides = [1, 1]} : vector<8x384xf32> to vector<8x256xf32>
    %79 = arith.negf %78 : vector<8x256xf32>
    %80 = math.exp %79 : vector<8x256xf32>
    %cst_18 = arith.constant 1.000000e+00 : f32
    %81 = vector.broadcast %cst_18 : f32 to vector<8x256xf32>
    %82 = arith.addf %81, %80 : vector<8x256xf32>
    %83 = arith.divf %81, %82 : vector<8x256xf32>
    %84 = vector.extract_strided_slice %83 {offsets = [0, 0], sizes = [8, 128], strides = [1, 1]} : vector<8x256xf32> to vector<8x128xf32>
    %85 = vector.extract_strided_slice %83 {offsets = [0, 128], sizes = [8, 128], strides = [1, 1]} : vector<8x256xf32> to vector<8x128xf32>
    %86 = vector.extract_strided_slice %74 {offsets = [0, 256], sizes = [8, 128], strides = [1, 1]} : vector<8x384xf32> to vector<8x128xf32>
    %87 = vector.extract_strided_slice %76 {offsets = [0, 256], sizes = [8, 128], strides = [1, 1]} : vector<8x384xf32> to vector<8x128xf32>
    %88 = arith.mulf %84, %87 : vector<8x128xf32>
    %89 = arith.addf %86, %88 : vector<8x128xf32>
    %90 = math.tanh %89 : vector<8x128xf32>
    %cst_19 = arith.constant 1.000000e+00 : f32
    %91 = vector.broadcast %cst_19 : f32 to vector<8x128xf32>
    %92 = arith.subf %91, %85 : vector<8x128xf32>
    %93 = arith.mulf %92, %90 : vector<8x128xf32>
    %94 = arith.mulf %85, %73 : vector<8x128xf32>
    %95 = arith.addf %93, %94 : vector<8x128xf32>
    %96 = vector.extract_strided_slice %2 {offsets = [32, 0], sizes = [8, 384], strides = [1, 1]} : vector<64x384xf32> to vector<8x384xf32>
    %cst_20 = arith.constant dense<0.000000e+00> : vector<8x384xf32>
    %97 = tpu.matmul %95, %3, %cst_20 {dimension_numbers = #tpu.dot_dimension_numbers<[1], [0], [0], [1], [0, 0, 1, 1], [], []>} : vector<8x128xf32>, vector<128x384xf32>, vector<8x384xf32> -> vector<8x384xf32>
    %98 = arith.addf %97, %6 : vector<8x384xf32>
    %99 = arith.addf %96, %98 : vector<8x384xf32>
    %100 = vector.extract_strided_slice %99 {offsets = [0, 0], sizes = [8, 256], strides = [1, 1]} : vector<8x384xf32> to vector<8x256xf32>
    %101 = arith.negf %100 : vector<8x256xf32>
    %102 = math.exp %101 : vector<8x256xf32>
    %cst_21 = arith.constant 1.000000e+00 : f32
    %103 = vector.broadcast %cst_21 : f32 to vector<8x256xf32>
    %104 = arith.addf %103, %102 : vector<8x256xf32>
    %105 = arith.divf %103, %104 : vector<8x256xf32>
    %106 = vector.extract_strided_slice %105 {offsets = [0, 0], sizes = [8, 128], strides = [1, 1]} : vector<8x256xf32> to vector<8x128xf32>
    %107 = vector.extract_strided_slice %105 {offsets = [0, 128], sizes = [8, 128], strides = [1, 1]} : vector<8x256xf32> to vector<8x128xf32>
    %108 = vector.extract_strided_slice %96 {offsets = [0, 256], sizes = [8, 128], strides = [1, 1]} : vector<8x384xf32> to vector<8x128xf32>
    %109 = vector.extract_strided_slice %98 {offsets = [0, 256], sizes = [8, 128], strides = [1, 1]} : vector<8x384xf32> to vector<8x128xf32>
    %110 = arith.mulf %106, %109 : vector<8x128xf32>
    %111 = arith.addf %108, %110 : vector<8x128xf32>
    %112 = math.tanh %111 : vector<8x128xf32>
    %cst_22 = arith.constant 1.000000e+00 : f32
    %113 = vector.broadcast %cst_22 : f32 to vector<8x128xf32>
    %114 = arith.subf %113, %107 : vector<8x128xf32>
    %115 = arith.mulf %114, %112 : vector<8x128xf32>
    %116 = arith.mulf %107, %95 : vector<8x128xf32>
    %117 = arith.addf %115, %116 : vector<8x128xf32>
    %118 = vector.extract_strided_slice %2 {offsets = [40, 0], sizes = [8, 384], strides = [1, 1]} : vector<64x384xf32> to vector<8x384xf32>
    %cst_23 = arith.constant dense<0.000000e+00> : vector<8x384xf32>
    %119 = tpu.matmul %117, %3, %cst_23 {dimension_numbers = #tpu.dot_dimension_numbers<[1], [0], [0], [1], [0, 0, 1, 1], [], []>} : vector<8x128xf32>, vector<128x384xf32>, vector<8x384xf32> -> vector<8x384xf32>
    %120 = arith.addf %119, %6 : vector<8x384xf32>
    %121 = arith.addf %118, %120 : vector<8x384xf32>
    %122 = vector.extract_strided_slice %121 {offsets = [0, 0], sizes = [8, 256], strides = [1, 1]} : vector<8x384xf32> to vector<8x256xf32>
    %123 = arith.negf %122 : vector<8x256xf32>
    %124 = math.exp %123 : vector<8x256xf32>
    %cst_24 = arith.constant 1.000000e+00 : f32
    %125 = vector.broadcast %cst_24 : f32 to vector<8x256xf32>
    %126 = arith.addf %125, %124 : vector<8x256xf32>
    %127 = arith.divf %125, %126 : vector<8x256xf32>
    %128 = vector.extract_strided_slice %127 {offsets = [0, 0], sizes = [8, 128], strides = [1, 1]} : vector<8x256xf32> to vector<8x128xf32>
    %129 = vector.extract_strided_slice %127 {offsets = [0, 128], sizes = [8, 128], strides = [1, 1]} : vector<8x256xf32> to vector<8x128xf32>
    %130 = vector.extract_strided_slice %118 {offsets = [0, 256], sizes = [8, 128], strides = [1, 1]} : vector<8x384xf32> to vector<8x128xf32>
    %131 = vector.extract_strided_slice %120 {offsets = [0, 256], sizes = [8, 128], strides = [1, 1]} : vector<8x384xf32> to vector<8x128xf32>
    %132 = arith.mulf %128, %131 : vector<8x128xf32>
    %133 = arith.addf %130, %132 : vector<8x128xf32>
    %134 = math.tanh %133 : vector<8x128xf32>
    %cst_25 = arith.constant 1.000000e+00 : f32
    %135 = vector.broadcast %cst_25 : f32 to vector<8x128xf32>
    %136 = arith.subf %135, %129 : vector<8x128xf32>
    %137 = arith.mulf %136, %134 : vector<8x128xf32>
    %138 = arith.mulf %129, %117 : vector<8x128xf32>
    %139 = arith.addf %137, %138 : vector<8x128xf32>
    %140 = vector.extract_strided_slice %2 {offsets = [48, 0], sizes = [8, 384], strides = [1, 1]} : vector<64x384xf32> to vector<8x384xf32>
    %cst_26 = arith.constant dense<0.000000e+00> : vector<8x384xf32>
    %141 = tpu.matmul %139, %3, %cst_26 {dimension_numbers = #tpu.dot_dimension_numbers<[1], [0], [0], [1], [0, 0, 1, 1], [], []>} : vector<8x128xf32>, vector<128x384xf32>, vector<8x384xf32> -> vector<8x384xf32>
    %142 = arith.addf %141, %6 : vector<8x384xf32>
    %143 = arith.addf %140, %142 : vector<8x384xf32>
    %144 = vector.extract_strided_slice %143 {offsets = [0, 0], sizes = [8, 256], strides = [1, 1]} : vector<8x384xf32> to vector<8x256xf32>
    %145 = arith.negf %144 : vector<8x256xf32>
    %146 = math.exp %145 : vector<8x256xf32>
    %cst_27 = arith.constant 1.000000e+00 : f32
    %147 = vector.broadcast %cst_27 : f32 to vector<8x256xf32>
    %148 = arith.addf %147, %146 : vector<8x256xf32>
    %149 = arith.divf %147, %148 : vector<8x256xf32>
    %150 = vector.extract_strided_slice %149 {offsets = [0, 0], sizes = [8, 128], strides = [1, 1]} : vector<8x256xf32> to vector<8x128xf32>
    %151 = vector.extract_strided_slice %149 {offsets = [0, 128], sizes = [8, 128], strides = [1, 1]} : vector<8x256xf32> to vector<8x128xf32>
    %152 = vector.extract_strided_slice %140 {offsets = [0, 256], sizes = [8, 128], strides = [1, 1]} : vector<8x384xf32> to vector<8x128xf32>
    %153 = vector.extract_strided_slice %142 {offsets = [0, 256], sizes = [8, 128], strides = [1, 1]} : vector<8x384xf32> to vector<8x128xf32>
    %154 = arith.mulf %150, %153 : vector<8x128xf32>
    %155 = arith.addf %152, %154 : vector<8x128xf32>
    %156 = math.tanh %155 : vector<8x128xf32>
    %cst_28 = arith.constant 1.000000e+00 : f32
    %157 = vector.broadcast %cst_28 : f32 to vector<8x128xf32>
    %158 = arith.subf %157, %151 : vector<8x128xf32>
    %159 = arith.mulf %158, %156 : vector<8x128xf32>
    %160 = arith.mulf %151, %139 : vector<8x128xf32>
    %161 = arith.addf %159, %160 : vector<8x128xf32>
    %162 = vector.extract_strided_slice %2 {offsets = [56, 0], sizes = [8, 384], strides = [1, 1]} : vector<64x384xf32> to vector<8x384xf32>
    %cst_29 = arith.constant dense<0.000000e+00> : vector<8x384xf32>
    %163 = tpu.matmul %161, %3, %cst_29 {dimension_numbers = #tpu.dot_dimension_numbers<[1], [0], [0], [1], [0, 0, 1, 1], [], []>} : vector<8x128xf32>, vector<128x384xf32>, vector<8x384xf32> -> vector<8x384xf32>
    %164 = arith.addf %163, %6 : vector<8x384xf32>
    %165 = arith.addf %162, %164 : vector<8x384xf32>
    %166 = vector.extract_strided_slice %165 {offsets = [0, 0], sizes = [8, 256], strides = [1, 1]} : vector<8x384xf32> to vector<8x256xf32>
    %167 = arith.negf %166 : vector<8x256xf32>
    %168 = math.exp %167 : vector<8x256xf32>
    %cst_30 = arith.constant 1.000000e+00 : f32
    %169 = vector.broadcast %cst_30 : f32 to vector<8x256xf32>
    %170 = arith.addf %169, %168 : vector<8x256xf32>
    %171 = arith.divf %169, %170 : vector<8x256xf32>
    %172 = vector.extract_strided_slice %171 {offsets = [0, 0], sizes = [8, 128], strides = [1, 1]} : vector<8x256xf32> to vector<8x128xf32>
    %173 = vector.extract_strided_slice %171 {offsets = [0, 128], sizes = [8, 128], strides = [1, 1]} : vector<8x256xf32> to vector<8x128xf32>
    %174 = vector.extract_strided_slice %162 {offsets = [0, 256], sizes = [8, 128], strides = [1, 1]} : vector<8x384xf32> to vector<8x128xf32>
    %175 = vector.extract_strided_slice %164 {offsets = [0, 256], sizes = [8, 128], strides = [1, 1]} : vector<8x384xf32> to vector<8x128xf32>
    %176 = arith.mulf %172, %175 : vector<8x128xf32>
    %177 = arith.addf %174, %176 : vector<8x128xf32>
    %178 = math.tanh %177 : vector<8x128xf32>
    %cst_31 = arith.constant 1.000000e+00 : f32
    %179 = vector.broadcast %cst_31 : f32 to vector<8x128xf32>
    %180 = arith.subf %179, %173 : vector<8x128xf32>
    %181 = arith.mulf %180, %178 : vector<8x128xf32>
    %182 = arith.mulf %173, %161 : vector<8x128xf32>
    %183 = arith.addf %181, %182 : vector<8x128xf32>
    %c0_32 = arith.constant 0 : index
    %c0_33 = arith.constant 0 : index
    %184 = vector.load %arg5[%c0_32, %c0_33] : memref<128x128xf32, #tpu.memory_space<vmem>>, vector<128x128xf32>
    %cst_34 = arith.constant dense<0.000000e+00> : vector<8x128xf32>
    %185 = tpu.matmul %183, %184, %cst_34 {dimension_numbers = #tpu.dot_dimension_numbers<[1], [0], [0], [1], [0, 0, 1, 1], [], []>} : vector<8x128xf32>, vector<128x128xf32>, vector<8x128xf32> -> vector<8x128xf32>
    %c0_35 = arith.constant 0 : index
    %c0_36 = arith.constant 0 : index
    %186 = vector.load %arg7[%c0_35, %c0_36] : memref<1x384xf32, #tpu.memory_space<vmem>>, vector<1x128xf32>
    %187 = vector.broadcast %186 : vector<1x128xf32> to vector<8x128xf32>
    %188 = arith.addf %185, %187 : vector<8x128xf32>
    %cst_37 = arith.constant 0.000000e+00 : f32
    %189 = vector.broadcast %cst_37 : f32 to vector<8x128xf32>
    %190 = arith.maximumf %188, %189 : vector<8x128xf32>
    %c0_38 = arith.constant 0 : index
    %c0_39 = arith.constant 0 : index
    %191 = vector.load %arg6[%c0_38, %c0_39] : memref<128x256xf32, #tpu.memory_space<vmem>>, vector<128x256xf32>
    %cst_40 = arith.constant dense<0.000000e+00> : vector<8x256xf32>
    %192 = tpu.matmul %190, %191, %cst_40 {dimension_numbers = #tpu.dot_dimension_numbers<[1], [0], [0], [1], [0, 0, 1, 1], [], []>} : vector<8x128xf32>, vector<128x256xf32>, vector<8x256xf32> -> vector<8x256xf32>
    %c0_41 = arith.constant 0 : index
    %c128 = arith.constant 128 : index
    %193 = vector.load %arg7[%c0_41, %c128] : memref<1x384xf32, #tpu.memory_space<vmem>>, vector<1x256xf32>
    %194 = vector.broadcast %193 : vector<1x256xf32> to vector<8x256xf32>
    %195 = arith.addf %192, %194 : vector<8x256xf32>
    %196 = vector.extract_strided_slice %195 {offsets = [0, 0], sizes = [8, 16], strides = [1, 1]} : vector<8x256xf32> to vector<8x16xf32>
    %197 = vector.extract_strided_slice %195 {offsets = [0, 128], sizes = [8, 16], strides = [1, 1]} : vector<8x256xf32> to vector<8x16xf32>
    %198 = arith.negf %196 : vector<8x16xf32>
    %199 = math.exp %198 : vector<8x16xf32>
    %cst_42 = arith.constant 1.000000e+00 : f32
    %200 = vector.broadcast %cst_42 : f32 to vector<8x16xf32>
    %201 = arith.addf %200, %199 : vector<8x16xf32>
    %202 = arith.divf %200, %201 : vector<8x16xf32>
    %cst_43 = arith.constant 0.000000e+00 : f32
    %203 = vector.broadcast %cst_43 : f32 to vector<8x16xf32>
    %204 = arith.maximumf %197, %203 : vector<8x16xf32>
    %205 = math.absf %197 : vector<8x16xf32>
    %cst_44 = arith.constant 0.000000e+00 : f32
    %206 = vector.broadcast %cst_44 : f32 to vector<8x16xf32>
    %207 = arith.subf %206, %205 : vector<8x16xf32>
    %208 = math.exp %207 : vector<8x16xf32>
    %cst_45 = arith.constant 1.000000e+00 : f32
    %209 = vector.broadcast %cst_45 : f32 to vector<8x16xf32>
    %210 = arith.addf %209, %208 : vector<8x16xf32>
    %211 = math.log %210 : vector<8x16xf32>
    %212 = arith.addf %204, %211 : vector<8x16xf32>
    %cst_46 = arith.constant 0.00999999977 : f32
    %213 = vector.broadcast %cst_46 : f32 to vector<8x16xf32>
    %214 = arith.addf %213, %212 : vector<8x16xf32>
    %cst_47 = arith.constant -15.9423847 : f32
    %cst_48 = arith.constant 15.9423847 : f32
    %215 = vector.broadcast %cst_47 : f32 to vector<8x16xf32>
    %216 = arith.maximumf %215, %196 : vector<8x16xf32>
    %217 = vector.broadcast %cst_48 : f32 to vector<8x16xf32>
    %218 = arith.minimumf %217, %216 : vector<8x16xf32>
    %c0_49 = arith.constant 0 : index
    %c0_50 = arith.constant 0 : index
    %219 = vector.load %arg1[%c0_49, %c0_50] : memref<8x16xf32, #tpu.memory_space<vmem>>, vector<8x16xf32>
    %cst_51 = arith.constant 1.1920929E-7 : f32
    %cst_52 = arith.constant 0.99999988 : f32
    %220 = vector.broadcast %cst_51 : f32 to vector<8x16xf32>
    %221 = arith.maximumf %220, %219 : vector<8x16xf32>
    %222 = vector.broadcast %cst_52 : f32 to vector<8x16xf32>
    %223 = arith.minimumf %222, %221 : vector<8x16xf32>
    %224 = math.log %223 : vector<8x16xf32>
    %cst_53 = arith.constant 1.000000e+00 : f32
    %225 = vector.broadcast %cst_53 : f32 to vector<8x16xf32>
    %226 = arith.subf %225, %223 : vector<8x16xf32>
    %227 = math.log %226 : vector<8x16xf32>
    %228 = arith.subf %224, %227 : vector<8x16xf32>
    %229 = arith.addf %228, %218 : vector<8x16xf32>
    %230 = arith.divf %229, %214 : vector<8x16xf32>
    %231 = math.exp %230 : vector<8x16xf32>
    %232 = arith.negf %231 : vector<8x16xf32>
    %233 = math.exp %232 : vector<8x16xf32>
    %cst_54 = arith.constant 1.000000e+00 : f32
    %234 = vector.broadcast %cst_54 : f32 to vector<8x16xf32>
    %235 = arith.addf %234, %233 : vector<8x16xf32>
    %236 = arith.divf %234, %235 : vector<8x16xf32>
    %c0_55 = arith.constant 0 : index
    %c0_56 = arith.constant 0 : index
    %c0_57 = arith.constant 0 : index
    %237 = vector.load %arg8[%c0_55, %c0_56, %c0_57] : memref<3x8x16xf32, #tpu.memory_space<vmem>>, vector<1x8x16xf32>
    %238 = vector.shape_cast %237 : vector<1x8x16xf32> to vector<8x16xf32>
    %239 = vector.shape_cast %236 : vector<8x16xf32> to vector<1x8x16xf32>
    tpu.vector_store %arg8[%c0_55, %c0_56, %c0_57], %239 {strides = array<i32>} : memref<3x8x16xf32, #tpu.memory_space<vmem>>, vector<1x8x16xf32>,
    %c1 = arith.constant 1 : index
    %c0_58 = arith.constant 0 : index
    %c0_59 = arith.constant 0 : index
    %240 = vector.load %arg8[%c1, %c0_58, %c0_59] : memref<3x8x16xf32, #tpu.memory_space<vmem>>, vector<1x8x16xf32>
    %241 = vector.shape_cast %240 : vector<1x8x16xf32> to vector<8x16xf32>
    %242 = vector.shape_cast %202 : vector<8x16xf32> to vector<1x8x16xf32>
    tpu.vector_store %arg8[%c1, %c0_58, %c0_59], %242 {strides = array<i32>} : memref<3x8x16xf32, #tpu.memory_space<vmem>>, vector<1x8x16xf32>,
    %c2 = arith.constant 2 : index
    %c0_60 = arith.constant 0 : index
    %c0_61 = arith.constant 0 : index
    %243 = vector.load %arg8[%c2, %c0_60, %c0_61] : memref<3x8x16xf32, #tpu.memory_space<vmem>>, vector<1x8x16xf32>
    %244 = vector.shape_cast %243 : vector<1x8x16xf32> to vector<8x16xf32>
    %245 = vector.shape_cast %214 : vector<8x16xf32> to vector<1x8x16xf32>
    tpu.vector_store %arg8[%c2, %c0_60, %c0_61], %245 {strides = array<i32>} : memref<3x8x16xf32, #tpu.memory_space<vmem>>, vector<1x8x16xf32>,
    return
  }
}

</mosaic_0001>

<llo_original>
// kernel: tpu_custom_call.1
$region0: #{tpu_custom_call.1}
  #allocation0 [shape = 'u32[]', space=smem, size = 0x4, offset = 0x4, fixed_abs, tag = 'smem constant byte address 0x4 - core index']
  #allocation1 [shape = 'u32[144,128]{1,0:T(1,128)}', space=vmem, size = 0x12000, scoped, tag = 'internal scratch']
  %s0 = inlined_call_operand.vmem [shape: f32[64,17], index: 0, kind: input, shape index: {}]
  %s1 = inlined_call_operand.vmem [shape: f32[8,16], index: 1, kind: input, shape index: {}]
  %s2 = inlined_call_operand.vmem [shape: f32[17,384], index: 2, kind: input, shape index: {}]
  %s3 = inlined_call_operand.hbm [shape: f32[128,384], index: 3, kind: input, shape index: {}]
  %s4 = inlined_call_operand.vmem [shape: f32[1,384], index: 4, kind: input, shape index: {}]
  %s5 = inlined_call_operand.hbm [shape: f32[128,128], index: 5, kind: input, shape index: {}]
  %s6 = inlined_call_operand.hbm [shape: f32[128,256], index: 6, kind: input, shape index: {}]
  %s7 = inlined_call_operand.vmem [shape: f32[1,384], index: 7, kind: input, shape index: {}]
  %s8 = inlined_call_operand.hbm [shape: f32[3,8,16], index: 8, kind: output, shape index: {}]
  %s9 = sld [smem:[#allocation0]]
  $region54: #{tpu_custom_call.1} parent=0
    _
  %s11 = ssub.s32 1, %s9
  %s12 = scalar_select 0, %s11, %s9
  $region1: #{tpu_custom_call.1} parent=0
    #allocation2 [shape = 'u8[196608]{0}', space=vmem, size = 0x30000, scoped, tag = 'input window, operand 3, single buffered']
    #allocation3 [shape = 's32[1]{0}', space=sflag, size = 0x4, scoped, tag = 'scoped memory for tpu_custom_call.1']
    #allocation4 [shape = 's32[1]{0}', space=sflag, size = 0x4, scoped, tag = 'scoped memory for tpu_custom_call.1']
    #allocation5 [shape = 'u8[65536]{0}', space=vmem, size = 0x10000, scoped, tag = 'input window, operand 5, single buffered']
    #allocation6 [shape = 's32[1]{0}', space=sflag, size = 0x4, scoped, tag = 'scoped memory for tpu_custom_call.1']
    #allocation7 [shape = 'u8[131072]{0}', space=vmem, size = 0x20000, scoped, tag = 'input window, operand 6, single buffered']
    #allocation8 [shape = 'u8[12288]{0}', space=vmem, size = 0x3000, scoped, tag = 'output window, operand 0, single buffered']
    %13 = vsyncpa [#allocation3], 0
    %14 = vsyncpa [#allocation6], 0
    %15 = vsyncpa [#allocation4], 0
    // Predicated region
    $region2: #{tpu_custom_call.1} parent=1 // pred_check
      _
    $region3: #{tpu_custom_call.1} parent=1 // pred_check_branch
      %17 = sbr.rel (0) target = $region5
    $region4: #{tpu_custom_call.1} parent=1 // pred_region
      _
    $region5: #{tpu_custom_call.1} parent=1 // pred_fallthru
      _
    // Predicated region
    $region6: #{tpu_custom_call.1} parent=1 // pred_check
      _
    $region7: #{tpu_custom_call.1} parent=1 // pred_check_branch
      %19 = sbr.rel (0) target = $region9
    $region8: #{tpu_custom_call.1} parent=1 // pred_region
      _
    $region9: #{tpu_custom_call.1} parent=1 // pred_fallthru
      _
    // Predicated region
    $region10: #{tpu_custom_call.1} parent=1 // pred_check
      _
    $region11: #{tpu_custom_call.1} parent=1 // pred_check_branch
      %21 = sbr.rel (0) target = $region13
    $region12: #{tpu_custom_call.1} parent=1 // pred_region
      _
    $region13: #{tpu_custom_call.1} parent=1 // pred_fallthru
      _
    // Predicated region
    $region14: #{tpu_custom_call.1} parent=1 // pred_check
      _
    $region15: #{tpu_custom_call.1} parent=1 // pred_check_branch
      %23 = sbr.rel (0) target = $region17
    $region16: #{tpu_custom_call.1} parent=1 // pred_region
      %s25 = ssub.s32 6144, 6144
      %26 = vsyncadd [#allocation3], %s25
      %s27 = sshll.u32 [#allocation2], 4
      %s28 = int_to_ptr.vmem [resolvable:$true] %s27
      %33 = dma.hbm_to_vmem [thread:$0]  %s3, 6144, %s28, [#allocation3], 384, 384, 24
    $region17: #{tpu_custom_call.1} parent=1 // pred_fallthru
      _
    // Predicated region
    $region18: #{tpu_custom_call.1} parent=1 // pred_check
      _
    $region19: #{tpu_custom_call.1} parent=1 // pred_check_branch
      %35 = sbr.rel (0) target = $region21
    $region20: #{tpu_custom_call.1} parent=1 // pred_region
      _
    $region21: #{tpu_custom_call.1} parent=1 // pred_fallthru
      _
    // Predicated region
    $region22: #{tpu_custom_call.1} parent=1 // pred_check
      _
    $region23: #{tpu_custom_call.1} parent=1 // pred_check_branch
      %37 = sbr.rel (0) target = $region25
    $region24: #{tpu_custom_call.1} parent=1 // pred_region
      %s39 = ssub.s32 2048, 2048
      %40 = vsyncadd [#allocation6], %s39
      %s41 = sshll.u32 [#allocation5], 4
      %s42 = int_to_ptr.vmem [resolvable:$true] %s41
      %47 = dma.hbm_to_vmem [thread:$0]  %s5, 2048, %s42, [#allocation6], 128, 128, 8
    $region25: #{tpu_custom_call.1} parent=1 // pred_fallthru
      _
    // Predicated region
    $region26: #{tpu_custom_call.1} parent=1 // pred_check
      _
    $region27: #{tpu_custom_call.1} parent=1 // pred_check_branch
      %49 = sbr.rel (0) target = $region29
    $region28: #{tpu_custom_call.1} parent=1 // pred_region
      %s51 = ssub.s32 4096, 4096
      %52 = vsyncadd [#allocation6], %s51
      %s53 = sshll.u32 [#allocation7], 4
      %s54 = int_to_ptr.vmem [resolvable:$true] %s53
      %59 = dma.hbm_to_vmem [thread:$0]  %s6, 4096, %s54, [#allocation6], 256, 256, 16
    $region29: #{tpu_custom_call.1} parent=1 // pred_fallthru
      _
    // Predicated region
    $region30: #{tpu_custom_call.1} parent=1 // pred_check
      _
    $region31: #{tpu_custom_call.1} parent=1 // pred_check_branch
      %61 = sbr.rel (0) target = $region33
    $region32: #{tpu_custom_call.1} parent=1 // pred_region
      _
    $region33: #{tpu_custom_call.1} parent=1 // pred_fallthru
      _
    // Predicated region
    $region34: #{tpu_custom_call.1} parent=1 // pred_check
      _
    $region35: #{tpu_custom_call.1} parent=1 // pred_check_branch
      %63 = sbr.rel (0) target = $region37
    $region36: #{tpu_custom_call.1} parent=1 // pred_region
      %64 = dma.done [#allocation3], 6144
    $region37: #{tpu_custom_call.1} parent=1 // pred_fallthru
      _
    // Predicated region
    $region38: #{tpu_custom_call.1} parent=1 // pred_check
      _
    $region39: #{tpu_custom_call.1} parent=1 // pred_check_branch
      %66 = sbr.rel (0) target = $region41
    $region40: #{tpu_custom_call.1} parent=1 // pred_region
      %67 = dma.done [#allocation6], 2048
    $region41: #{tpu_custom_call.1} parent=1 // pred_fallthru
      _
    // Predicated region
    $region42: #{tpu_custom_call.1} parent=1 // pred_check
      _
    $region43: #{tpu_custom_call.1} parent=1 // pred_check_branch
      %69 = sbr.rel (0) target = $region45
    $region44: #{tpu_custom_call.1} parent=1 // pred_region
      %70 = dma.done [#allocation6], 4096
    $region45: #{tpu_custom_call.1} parent=1 // pred_fallthru
      _
    %v71 = vld [vmem:[%s0] sm:$0xff]
    %v72 = vld [vmem:[%s0 + $0x8] sm:$0xff]
    %v73 = vld [vmem:[%s0 + $0x10] sm:$0xff]
    %v74 = vld [vmem:[%s0 + $0x18] sm:$0xff]
    %v75 = vld [vmem:[%s0 + $0x20] sm:$0xff]
    %v76 = vld [vmem:[%s0 + $0x28] sm:$0xff]
    %v77 = vld [vmem:[%s0 + $0x30] sm:$0xff]
    %v78 = vld [vmem:[%s0 + $0x38] sm:$0xff]
    %v79 = vld [vmem:[%s2] sm:$0xff]
    %v80 = vld [vmem:[%s2 + $0x8] sm:$0xff]
    %v81 = vld [vmem:[%s2 + $0x10] sm:$0xff]
    %v82 = vld [vmem:[%s2 + $0x18] sm:$0xff]
    %v83 = vld [vmem:[%s2 + $0x20] sm:$0xff]
    %v84 = vld [vmem:[%s2 + $0x28] sm:$0xff]
    %v85 = vld [vmem:[%s2 + $0x30] sm:$0x1]
    %v86 = vld [vmem:[%s2 + $0x38] sm:$0x1]
    %v87 = vld [vmem:[%s2 + $0x40] sm:$0x1]
    %vm88 = vcmask 138240
    %v90 = vsel %vm88, %v71, 0
    %v93 = vsel %vm88, %v72, 0
    %v96 = vsel %vm88, %v73, 0
    %v99 = vsel %vm88, %v74, 0
    %v102 = vsel %vm88, %v75, 0
    %v105 = vsel %vm88, %v76, 0
    %v108 = vsel %vm88, %v77, 0
    %v111 = vsel %vm88, %v78, 0
    %vm113 = vcmask 1040384
    %v115 = vsel %vm113, %v85, 0
    %v118 = vsel %vm113, %v86, 0
    %v121 = vsel %vm113, %v87, 0
    %123 = vmatprep.subr.mxu0 %v80
    %124 = vmatpush1.msra.mxu0 %v79
    %125 = vmatprep.subr.mxu0 %v83
    %126 = vmatpush1.msra.mxu0 %v82
    %127 = vmatprep.subr.mxu0 %v118
    %128 = vmatpush1.msra.mxu0 %v115
    %129 = vmatprep.subr.mxu0 0.0
    %130 = vmatpush1.msra.mxu0 0.0
    %131 = vmatprep.subr.mxu0 0.0
    %132 = vmatpush1.msra.mxu0 0.0
    %133 = vmatprep.subr.mxu0 0.0
    %134 = vmatpush1.msra.mxu0 0.0
    %135 = vmatprep.subr.mxu0 0.0
    %136 = vmatpush1.msra.mxu0 0.0
    %137 = vmatprep.subr.mxu0 0.0
    %138 = vmatpush1.msra.mxu0 0.0
    %139 = vmatprep.subr.mxu0 0.0
    %140 = vmatpush1.msra.mxu0 0.0
    %141 = vmatprep.subr.mxu0 0.0
    %142 = vmatpush1.msra.mxu0 0.0
    %143 = vmatprep.subr.mxu0 0.0
    %144 = vmatpush1.msra.mxu0 0.0
    %145 = vmatprep.subr.mxu0 0.0
    %146 = vmatpush1.msra.mxu0 0.0
    %147 = vmatprep.subr.mxu0 0.0
    %148 = vmatpush1.msra.mxu0 0.0
    %149 = vmatprep.subr.mxu0 0.0
    %150 = vmatpush1.msra.mxu0 0.0
    %151 = vmatprep.subr.mxu0 0.0
    %152 = vmatpush1.msra.mxu0 0.0
    %153 = vmatprep.subr.mxu0 0.0
    %154 = vmatpush1.msra.mxu0 0.0
    %155 = vmatprep.subr.mxu0 0.0
    %156 = vmatpush1.msra.mxu0 0.0
    %157 = vmatprep.subr.mxu0 0.0
    %158 = vmatpush1.msra.mxu0 0.0
    %159 = vmatprep.subr.mxu0 0.0
    %160 = vmatpush1.msra.mxu0 0.0
    %161 = vmatprep.subr.mxu0 0.0
    %162 = vmatpush1.msra.mxu0 0.0
    %163 = vmatprep.subr.mxu0 0.0
    %164 = vmatpush1.msra.mxu0 0.0
    %165 = vmatprep.subr.mxu0 0.0
    %166 = vmatpush1.msra.mxu0 0.0
    %167 = vmatprep.subr.mxu0 0.0
    %168 = vmatpush1.msra.mxu0 0.0
    %169 = vmatprep.subr.mxu0 0.0
    %170 = vmatpush1.msra.mxu0 0.0
    %171 = vmatprep.subr.mxu0 0.0
    %172 = vmatpush1.msra.mxu0 0.0
    %173 = vmatprep.subr.mxu0 0.0
    %174 = vmatpush1.msra.mxu0 0.0
    %175 = vmatprep.subr.mxu0 0.0
    %176 = vmatpush1.msra.mxu0 0.0
    %177 = vmatprep.subr.mxu0 0.0
    %178 = vmatpush1.msra.mxu0 0.0
    %179 = vmatprep.subr.mxu0 0.0
    %180 = vmatpush1.msra.mxu0 0.0
    %181 = vmatprep.subr.mxu0 0.0
    %182 = vmatpush1.msra.mxu0 0.0
    %183 = vmatprep.subr.mxu0 0.0
    %184 = vmatpush1.msra.mxu0 0.0
    %185 = vmatprep.subr.mxu0 0.0
    %186 = vmatpush1.msra.mxu0 0.0
    %187 = vmatprep.mubr.f32.mxu0 0.0
    %188 = vmatmul.mubr.f32.gmra.mrb[0].mxu0 %v90
    %v189 = vpop.f32.mrb[0].mxu0
    %v190 = vadd.f32 0.0, %v189
    %v191 = vpop.f32.mrb[0].mxu0
    %v192 = vadd.f32 0.0, %v191
    %193 = vmatprep.mubr.f32.mxu0 0.0
    %194 = vmatmul.mubr.f32.gmra.mrb[0].mxu0 %v93
    %v195 = vpop.f32.mrb[0].mxu0
    %v196 = vadd.f32 0.0, %v195
    %v197 = vpop.f32.mrb[0].mxu0
    %v198 = vadd.f32 0.0, %v197
    %199 = vmatprep.mubr.f32.mxu0 0.0
    %200 = vmatmul.mubr.f32.gmra.mrb[0].mxu0 %v96
    %v201 = vpop.f32.mrb[0].mxu0
    %v202 = vadd.f32 0.0, %v201
    %v203 = vpop.f32.mrb[0].mxu0
    %v204 = vadd.f32 0.0, %v203
    %205 = vmatprep.mubr.f32.mxu0 0.0
    %206 = vmatmul.mubr.f32.gmra.mrb[0].mxu0 %v99
    %v207 = vpop.f32.mrb[0].mxu0
    %v208 = vadd.f32 0.0, %v207
    %v209 = vpop.f32.mrb[0].mxu0
    %v210 = vadd.f32 0.0, %v209
    %211 = vmatprep.mubr.f32.mxu0 0.0
    %212 = vmatmul.mubr.f32.gmra.mrb[0].mxu0 %v102
    %v213 = vpop.f32.mrb[0].mxu0
    %v214 = vadd.f32 0.0, %v213
    %v215 = vpop.f32.mrb[0].mxu0
    %v216 = vadd.f32 0.0, %v215
    %217 = vmatprep.mubr.f32.mxu0 0.0
    %218 = vmatmul.mubr.f32.gmra.mrb[0].mxu0 %v105
    %v219 = vpop.f32.mrb[0].mxu0
    %v220 = vadd.f32 0.0, %v219
    %v221 = vpop.f32.mrb[0].mxu0
    %v222 = vadd.f32 0.0, %v221
    %223 = vmatprep.mubr.f32.mxu0 0.0
    %224 = vmatmul.mubr.f32.gmra.mrb[0].mxu0 %v108
    %v225 = vpop.f32.mrb[0].mxu0
    %v226 = vadd.f32 0.0, %v225
    %v227 = vpop.f32.mrb[0].mxu0
    %v228 = vadd.f32 0.0, %v227
    %229 = vmatprep.mubr.f32.mxu0 0.0
    %230 = vmatmul.mubr.f32.gmra.mrb[0].mxu0 %v111
    %v231 = vpop.f32.mrb[0].mxu0
    %v232 = vadd.f32 0.0, %v231
    %v233 = vpop.f32.mrb[0].mxu0
    %v234 = vadd.f32 0.0, %v233
    %235 = vdwg.mxu0
    %236 = vmatprep.subr.mxu0 0.0
    %237 = vmatpush1.msra.mxu0 %v81
    %238 = vmatprep.subr.mxu0 0.0
    %239 = vmatpush1.msra.mxu0 %v84
    %240 = vmatprep.subr.mxu0 0.0
    %241 = vmatpush1.msra.mxu0 %v121
    %242 = vmatprep.subr.mxu0 0.0
    %243 = vmatpush1.msra.mxu0 0.0
    %244 = vmatprep.subr.mxu0 0.0
    %245 = vmatpush1.msra.mxu0 0.0
    %246 = vmatprep.subr.mxu0 0.0
    %247 = vmatpush1.msra.mxu0 0.0
    %248 = vmatprep.subr.mxu0 0.0
    %249 = vmatpush1.msra.mxu0 0.0
    %250 = vmatprep.subr.mxu0 0.0
    %251 = vmatpush1.msra.mxu0 0.0
    %252 = vmatprep.subr.mxu0 0.0
    %253 = vmatpush1.msra.mxu0 0.0
    %254 = vmatprep.subr.mxu0 0.0
    %255 = vmatpush1.msra.mxu0 0.0
    %256 = vmatprep.subr.mxu0 0.0
    %257 = vmatpush1.msra.mxu0 0.0
    %258 = vmatprep.subr.mxu0 0.0
    %259 = vmatpush1.msra.mxu0 0.0
    %260 = vmatprep.subr.mxu0 0.0
    %261 = vmatpush1.msra.mxu0 0.0
    %262 = vmatprep.subr.mxu0 0.0
    %263 = vmatpush1.msra.mxu0 0.0
    %264 = vmatprep.subr.mxu0 0.0
    %265 = vmatpush1.msra.mxu0 0.0
    %266 = vmatprep.subr.mxu0 0.0
    %267 = vmatpush1.msra.mxu0 0.0
    %268 = vmatprep.subr.mxu0 0.0
    %269 = vmatpush1.msra.mxu0 0.0
    %270 = vmatprep.subr.mxu0 0.0
    %271 = vmatpush1.msra.mxu0 0.0
    %272 = vmatprep.subr.mxu0 0.0
    %273 = vmatpush1.msra.mxu0 0.0
    %274 = vmatprep.subr.mxu0 0.0
    %275 = vmatpush1.msra.mxu0 0.0
    %276 = vmatprep.subr.mxu0 0.0
    %277 = vmatpush1.msra.mxu0 0.0
    %278 = vmatprep.subr.mxu0 0.0
    %279 = vmatpush1.msra.mxu0 0.0
    %280 = vmatprep.subr.mxu0 0.0
    %281 = vmatpush1.msra.mxu0 0.0
    %282 = vmatprep.subr.mxu0 0.0
    %283 = vmatpush1.msra.mxu0 0.0
    %284 = vmatprep.subr.mxu0 0.0
    %285 = vmatpush1.msra.mxu0 0.0
    %286 = vmatprep.subr.mxu0 0.0
    %287 = vmatpush1.msra.mxu0 0.0
    %288 = vmatprep.subr.mxu0 0.0
    %289 = vmatpush1.msra.mxu0 0.0
    %290 = vmatprep.subr.mxu0 0.0
    %291 = vmatpush1.msra.mxu0 0.0
    %292 = vmatprep.subr.mxu0 0.0
    %293 = vmatpush1.msra.mxu0 0.0
    %294 = vmatprep.subr.mxu0 0.0
    %295 = vmatpush1.msra.mxu0 0.0
    %296 = vmatprep.subr.mxu0 0.0
    %297 = vmatpush1.msra.mxu0 0.0
    %298 = vmatprep.subr.mxu0 0.0
    %299 = vmatpush1.msra.mxu0 0.0
    %300 = vmatprep.mubr.f32.mxu0 0.0
    %301 = vmatmul.mubr.f32.gmra.mrb[0].mxu0 %v90
    %v302 = vpop.f32.mrb[0].mxu0
    %v303 = vadd.f32 0.0, %v302
    %v304 = vpop.f32.mrb[0].mxu0
    %305 = vmatprep.mubr.f32.mxu0 0.0
    %306 = vmatmul.mubr.f32.gmra.mrb[0].mxu0 %v93
    %v307 = vpop.f32.mrb[0].mxu0
    %v308 = vadd.f32 0.0, %v307
    %v309 = vpop.f32.mrb[0].mxu0
    %310 = vmatprep.mubr.f32.mxu0 0.0
    %311 = vmatmul.mubr.f32.gmra.mrb[0].mxu0 %v96
    %v312 = vpop.f32.mrb[0].mxu0
    %v313 = vadd.f32 0.0, %v312
    %v314 = vpop.f32.mrb[0].mxu0
    %315 = vmatprep.mubr.f32.mxu0 0.0
    %316 = vmatmul.mubr.f32.gmra.mrb[0].mxu0 %v99
    %v317 = vpop.f32.mrb[0].mxu0
    %v318 = vadd.f32 0.0, %v317
    %v319 = vpop.f32.mrb[0].mxu0
    %320 = vmatprep.mubr.f32.mxu0 0.0
    %321 = vmatmul.mubr.f32.gmra.mrb[0].mxu0 %v102
    %v322 = vpop.f32.mrb[0].mxu0
    %v323 = vadd.f32 0.0, %v322
    %v324 = vpop.f32.mrb[0].mxu0
    %325 = vmatprep.mubr.f32.mxu0 0.0
    %326 = vmatmul.mubr.f32.gmra.mrb[0].mxu0 %v105
    %v327 = vpop.f32.mrb[0].mxu0
    %v328 = vadd.f32 0.0, %v327
    %v329 = vpop.f32.mrb[0].mxu0
    %330 = vmatprep.mubr.f32.mxu0 0.0
    %331 = vmatmul.mubr.f32.gmra.mrb[0].mxu0 %v108
    %v332 = vpop.f32.mrb[0].mxu0
    %v333 = vadd.f32 0.0, %v332
    %v334 = vpop.f32.mrb[0].mxu0
    %335 = vmatprep.mubr.f32.mxu0 0.0
    %336 = vmatmul.mubr.f32.gmra.mrb[0].mxu0 %v111
    %v337 = vpop.f32.mrb[0].mxu0
    %v338 = vadd.f32 0.0, %v337
    %v339 = vpop.f32.mrb[0].mxu0
    %340 = vdwg.mxu0
    %v341 = vld [vmem:[#allocation2] sm:$0xff]
    %v342 = vld [vmem:[#allocation2 + $0x8] sm:$0xff]
    %v343 = vld [vmem:[#allocation2 + $0x10] sm:$0xff]
    %v344 = vld [vmem:[#allocation2 + $0x18] sm:$0xff]
    %v345 = vld [vmem:[#allocation2 + $0x20] sm:$0xff]
    %v346 = vld [vmem:[#allocation2 + $0x28] sm:$0xff]
    %v347 = vld [vmem:[#allocation2 + $0x30] sm:$0xff]
    %v348 = vld [vmem:[#allocation2 + $0x38] sm:$0xff]
    %v349 = vld [vmem:[#allocation2 + $0x40] sm:$0xff]
    %v350 = vld [vmem:[#allocation2 + $0x48] sm:$0xff]
    %v351 = vld [vmem:[#allocation2 + $0x50] sm:$0xff]
    %v352 = vld [vmem:[#allocation2 + $0x58] sm:$0xff]
    %v353 = vld [vmem:[#allocation2 + $0x60] sm:$0xff]
    %v354 = vld [vmem:[#allocation2 + $0x68] sm:$0xff]
    %v355 = vld [vmem:[#allocation2 + $0x70] sm:$0xff]
    %v356 = vld [vmem:[#allocation2 + $0x78] sm:$0xff]
    %v357 = vld [vmem:[#allocation2 + $0x80] sm:$0xff]
    %v358 = vld [vmem:[#allocation2 + $0x88] sm:$0xff]
    %v359 = vld [vmem:[#allocation2 + $0x90] sm:$0xff]
    %v360 = vld [vmem:[#allocation2 + $0x98] sm:$0xff]
    %v361 = vld [vmem:[#allocation2 + $0xa0] sm:$0xff]
    %v362 = vld [vmem:[#allocation2 + $0xa8] sm:$0xff]
    %v363 = vld [vmem:[#allocation2 + $0xb0] sm:$0xff]
    %v364 = vld [vmem:[#allocation2 + $0xb8] sm:$0xff]
    %v365 = vld [vmem:[#allocation2 + $0xc0] sm:$0xff]
    %v366 = vld [vmem:[#allocation2 + $0xc8] sm:$0xff]
    %v367 = vld [vmem:[#allocation2 + $0xd0] sm:$0xff]
    %v368 = vld [vmem:[#allocation2 + $0xd8] sm:$0xff]
    %v369 = vld [vmem:[#allocation2 + $0xe0] sm:$0xff]
    %v370 = vld [vmem:[#allocation2 + $0xe8] sm:$0xff]
    %v371 = vld [vmem:[#allocation2 + $0xf0] sm:$0xff]
    %v372 = vld [vmem:[#allocation2 + $0xf8] sm:$0xff]
    %v373 = vld [vmem:[#allocation2 + $0x100] sm:$0xff]
    %v374 = vld [vmem:[#allocation2 + $0x108] sm:$0xff]
    %v375 = vld [vmem:[#allocation2 + $0x110] sm:$0xff]
    %v376 = vld [vmem:[#allocation2 + $0x118] sm:$0xff]
    %v377 = vld [vmem:[#allocation2 + $0x120] sm:$0xff]
    %v378 = vld [vmem:[#allocation2 + $0x128] sm:$0xff]
    %v379 = vld [vmem:[#allocation2 + $0x130] sm:$0xff]
    %v380 = vld [vmem:[#allocation2 + $0x138] sm:$0xff]
    %v381 = vld [vmem:[#allocation2 + $0x140] sm:$0xff]
    %v382 = vld [vmem:[#allocation2 + $0x148] sm:$0xff]
    %v383 = vld [vmem:[#allocation2 + $0x150] sm:$0xff]
    %v384 = vld [vmem:[#allocation2 + $0x158] sm:$0xff]
    %v385 = vld [vmem:[#allocation2 + $0x160] sm:$0xff]
    %v386 = vld [vmem:[#allocation2 + $0x168] sm:$0xff]
    %v387 = vld [vmem:[#allocation2 + $0x170] sm:$0xff]
    %v388 = vld [vmem:[#allocation2 + $0x178] sm:$0xff]
    %v389 = vld [vmem:[%s4] sm:$0x7]
    %v391 = vlaneseq
    %v392 = vshrl.u32 %v391, 7
    %v393 = vsub.s32 0, %v392
    %v394 = vrot.slane %v389, %v393
    %v395 = vlaneseq
    %v396 = vshrl.u32 %v395, 7
    %v397 = vsub.s32 1, %v396
    %v398 = vrot.slane %v389, %v397
    %v399 = vlaneseq
    %v400 = vshrl.u32 %v399, 7
    %v401 = vsub.s32 2, %v400
    %v402 = vrot.slane %v389, %v401
    %406 = vmatprep.subr.mxu0 %v342
    %407 = vmatpush1.msra.mxu0 %v341
    %408 = vmatprep.subr.mxu0 %v345
    %409 = vmatpush1.msra.mxu0 %v344
    %410 = vmatprep.subr.mxu0 %v348
    %411 = vmatpush1.msra.mxu0 %v347
    %412 = vmatprep.subr.mxu0 %v351
    %413 = vmatpush1.msra.mxu0 %v350
    %414 = vmatprep.subr.mxu0 %v354
    %415 = vmatpush1.msra.mxu0 %v353
    %416 = vmatprep.subr.mxu0 %v357
    %417 = vmatpush1.msra.mxu0 %v356
    %418 = vmatprep.subr.mxu0 %v360
    %419 = vmatpush1.msra.mxu0 %v359
    %420 = vmatprep.subr.mxu0 %v363
    %421 = vmatpush1.msra.mxu0 %v362
    %422 = vmatprep.subr.mxu0 %v366
    %423 = vmatpush1.msra.mxu0 %v365
    %424 = vmatprep.subr.mxu0 %v369
    %425 = vmatpush1.msra.mxu0 %v368
    %426 = vmatprep.subr.mxu0 %v372
    %427 = vmatpush1.msra.mxu0 %v371
    %428 = vmatprep.subr.mxu0 %v375
    %429 = vmatpush1.msra.mxu0 %v374
    %430 = vmatprep.subr.mxu0 %v378
    %431 = vmatpush1.msra.mxu0 %v377
    %432 = vmatprep.subr.mxu0 %v381
    %433 = vmatpush1.msra.mxu0 %v380
    %434 = vmatprep.subr.mxu0 %v384
    %435 = vmatpush1.msra.mxu0 %v383
    %436 = vmatprep.subr.mxu0 %v387
    %437 = vmatpush1.msra.mxu0 %v386
    %438 = vmatprep.subr.mxu0 0.0
    %439 = vmatpush1.msra.mxu0 0.0
    %440 = vmatprep.subr.mxu0 0.0
    %441 = vmatpush1.msra.mxu0 0.0
    %442 = vmatprep.subr.mxu0 0.0
    %443 = vmatpush1.msra.mxu0 0.0
    %444 = vmatprep.subr.mxu0 0.0
    %445 = vmatpush1.msra.mxu0 0.0
    %446 = vmatprep.subr.mxu0 0.0
    %447 = vmatpush1.msra.mxu0 0.0
    %448 = vmatprep.subr.mxu0 0.0
    %449 = vmatpush1.msra.mxu0 0.0
    %450 = vmatprep.subr.mxu0 0.0
    %451 = vmatpush1.msra.mxu0 0.0
    %452 = vmatprep.subr.mxu0 0.0
    %453 = vmatpush1.msra.mxu0 0.0
    %454 = vmatprep.subr.mxu0 0.0
    %455 = vmatpush1.msra.mxu0 0.0
    %456 = vmatprep.subr.mxu0 0.0
    %457 = vmatpush1.msra.mxu0 0.0
    %458 = vmatprep.subr.mxu0 0.0
    %459 = vmatpush1.msra.mxu0 0.0
    %460 = vmatprep.subr.mxu0 0.0
    %461 = vmatpush1.msra.mxu0 0.0
    %462 = vmatprep.subr.mxu0 0.0
    %463 = vmatpush1.msra.mxu0 0.0
    %464 = vmatprep.subr.mxu0 0.0
    %465 = vmatpush1.msra.mxu0 0.0
    %466 = vmatprep.subr.mxu0 0.0
    %467 = vmatpush1.msra.mxu0 0.0
    %468 = vmatprep.subr.mxu0 0.0
    %469 = vmatpush1.msra.mxu0 0.0
    %470 = vmatprep.mubr.f32.mxu0 0.0
    %471 = vmatmul.mubr.f32.gmra.mrb[0].mxu0 0.0
    %v472 = vpop.f32.mrb[0].mxu0
    %v473 = vadd.f32 %v394, %v472
    %v474 = vpop.f32.mrb[0].mxu0
    %v475 = vadd.f32 %v398, %v474
    %476 = vdwg.mxu0
    %477 = vmatprep.subr.mxu0 0.0
    %478 = vmatpush1.msra.mxu0 %v343
    %479 = vmatprep.subr.mxu0 0.0
    %480 = vmatpush1.msra.mxu0 %v346
    %481 = vmatprep.subr.mxu0 0.0
    %482 = vmatpush1.msra.mxu0 %v349
    %483 = vmatprep.subr.mxu0 0.0
    %484 = vmatpush1.msra.mxu0 %v352
    %485 = vmatprep.subr.mxu0 0.0
    %486 = vmatpush1.msra.mxu0 %v355
    %487 = vmatprep.subr.mxu0 0.0
    %488 = vmatpush1.msra.mxu0 %v358
    %489 = vmatprep.subr.mxu0 0.0
    %490 = vmatpush1.msra.mxu0 %v361
    %491 = vmatprep.subr.mxu0 0.0
    %492 = vmatpush1.msra.mxu0 %v364
    %493 = vmatprep.subr.mxu0 0.0
    %494 = vmatpush1.msra.mxu0 %v367
    %495 = vmatprep.subr.mxu0 0.0
    %496 = vmatpush1.msra.mxu0 %v370
    %497 = vmatprep.subr.mxu0 0.0
    %498 = vmatpush1.msra.mxu0 %v373
    %499 = vmatprep.subr.mxu0 0.0
    %500 = vmatpush1.msra.mxu0 %v376
    %501 = vmatprep.subr.mxu0 0.0
    %502 = vmatpush1.msra.mxu0 %v379
    %503 = vmatprep.subr.mxu0 0.0
    %504 = vmatpush1.msra.mxu0 %v382
    %505 = vmatprep.subr.mxu0 0.0
    %506 = vmatpush1.msra.mxu0 %v385
    %507 = vmatprep.subr.mxu0 0.0
    %508 = vmatpush1.msra.mxu0 %v388
    %509 = vmatprep.subr.mxu0 0.0
    %510 = vmatpush1.msra.mxu0 0.0
    %511 = vmatprep.subr.mxu0 0.0
    %512 = vmatpush1.msra.mxu0 0.0
    %513 = vmatprep.subr.mxu0 0.0
    %514 = vmatpush1.msra.mxu0 0.0
    %515 = vmatprep.subr.mxu0 0.0
    %516 = vmatpush1.msra.mxu0 0.0
    %517 = vmatprep.subr.mxu0 0.0
    %518 = vmatpush1.msra.mxu0 0.0
    %519 = vmatprep.subr.mxu0 0.0
    %520 = vmatpush1.msra.mxu0 0.0
    %521 = vmatprep.subr.mxu0 0.0
    %522 = vmatpush1.msra.mxu0 0.0
    %523 = vmatprep.subr.mxu0 0.0
    %524 = vmatpush1.msra.mxu0 0.0
    %525 = vmatprep.subr.mxu0 0.0
    %526 = vmatpush1.msra.mxu0 0.0
    %527 = vmatprep.subr.mxu0 0.0
    %528 = vmatpush1.msra.mxu0 0.0
    %529 = vmatprep.subr.mxu0 0.0
    %530 = vmatpush1.msra.mxu0 0.0
    %531 = vmatprep.subr.mxu0 0.0
    %532 = vmatpush1.msra.mxu0 0.0
    %533 = vmatprep.subr.mxu0 0.0
    %534 = vmatpush1.msra.mxu0 0.0
    %535 = vmatprep.subr.mxu0 0.0
    %536 = vmatpush1.msra.mxu0 0.0
    %537 = vmatprep.subr.mxu0 0.0
    %538 = vmatpush1.msra.mxu0 0.0
    %539 = vmatprep.subr.mxu0 0.0
    %540 = vmatpush1.msra.mxu0 0.0
    %541 = vmatprep.mubr.f32.mxu0 0.0
    %542 = vmatmul.mubr.f32.gmra.mrb[0].mxu0 0.0
    %v543 = vpop.f32.mrb[0].mxu0
    %v544 = vadd.f32 %v402, %v543
    %v545 = vpop.f32.mrb[0].mxu0
    %546 = vdwg.mxu0
    %v547 = vadd.f32 %v190, %v473
    %v548 = vadd.f32 %v192, %v475
    %v549 = vxor.u32 %v547, 2147483648
    %v550 = vxor.u32 %v548, 2147483648
    %v551 = vmul.f32 %v549, 1.442695
    %v552 = vpow.pop %v551
    %v553 = vmul.f32 %v550, 1.442695
    %v554 = vpow.pop %v553
    %v555 = vadd.f32 %v552, 1.0
    %v556 = vadd.f32 %v554, 1.0
    %v557 = vrcp.pop %v555
    %v558 = vmul.f32 1.0, %v557
    %v559 = vrcp.pop %v556
    %v560 = vmul.f32 1.0, %v559
    %v561 = vmul.f32 %v558, %v544
    %v562 = vadd.f32 %v303, %v561
    %v563 = vtanh.pop %v562
    %v564 = vsub.f32 1.0, %v560
    %v565 = vmul.f32 %v564, %v563
    %v566 = vmul.f32 %v560, 0.0
    %v567 = vadd.f32 %v565, %v566
    %568 = vmatprep.subr.mxu0 %v342
    %569 = vmatpush1.msra.mxu0 %v341
    %570 = vmatprep.subr.mxu0 %v345
    %571 = vmatpush1.msra.mxu0 %v344
    %572 = vmatprep.subr.mxu0 %v348
    %573 = vmatpush1.msra.mxu0 %v347
    %574 = vmatprep.subr.mxu0 %v351
    %575 = vmatpush1.msra.mxu0 %v350
    %576 = vmatprep.subr.mxu0 %v354
    %577 = vmatpush1.msra.mxu0 %v353
    %578 = vmatprep.subr.mxu0 %v357
    %579 = vmatpush1.msra.mxu0 %v356
    %580 = vmatprep.subr.mxu0 %v360
    %581 = vmatpush1.msra.mxu0 %v359
    %582 = vmatprep.subr.mxu0 %v363
    %583 = vmatpush1.msra.mxu0 %v362
    %584 = vmatprep.subr.mxu0 %v366
    %585 = vmatpush1.msra.mxu0 %v365
    %586 = vmatprep.subr.mxu0 %v369
    %587 = vmatpush1.msra.mxu0 %v368
    %588 = vmatprep.subr.mxu0 %v372
    %589 = vmatpush1.msra.mxu0 %v371
    %590 = vmatprep.subr.mxu0 %v375
    %591 = vmatpush1.msra.mxu0 %v374
    %592 = vmatprep.subr.mxu0 %v378
    %593 = vmatpush1.msra.mxu0 %v377
    %594 = vmatprep.subr.mxu0 %v381
    %595 = vmatpush1.msra.mxu0 %v380
    %596 = vmatprep.subr.mxu0 %v384
    %597 = vmatpush1.msra.mxu0 %v383
    %598 = vmatprep.subr.mxu0 %v387
    %599 = vmatpush1.msra.mxu0 %v386
    %600 = vmatprep.subr.mxu0 0.0
    %601 = vmatpush1.msra.mxu0 0.0
    %602 = vmatprep.subr.mxu0 0.0
    %603 = vmatpush1.msra.mxu0 0.0
    %604 = vmatprep.subr.mxu0 0.0
    %605 = vmatpush1.msra.mxu0 0.0
    %606 = vmatprep.subr.mxu0 0.0
    %607 = vmatpush1.msra.mxu0 0.0
    %608 = vmatprep.subr.mxu0 0.0
    %609 = vmatpush1.msra.mxu0 0.0
    %610 = vmatprep.subr.mxu0 0.0
    %611 = vmatpush1.msra.mxu0 0.0
    %612 = vmatprep.subr.mxu0 0.0
    %613 = vmatpush1.msra.mxu0 0.0
    %614 = vmatprep.subr.mxu0 0.0
    %615 = vmatpush1.msra.mxu0 0.0
    %616 = vmatprep.subr.mxu0 0.0
    %617 = vmatpush1.msra.mxu0 0.0
    %618 = vmatprep.subr.mxu0 0.0
    %619 = vmatpush1.msra.mxu0 0.0
    %620 = vmatprep.subr.mxu0 0.0
    %621 = vmatpush1.msra.mxu0 0.0
    %622 = vmatprep.subr.mxu0 0.0
    %623 = vmatpush1.msra.mxu0 0.0
    %624 = vmatprep.subr.mxu0 0.0
    %625 = vmatpush1.msra.mxu0 0.0
    %626 = vmatprep.subr.mxu0 0.0
    %627 = vmatpush1.msra.mxu0 0.0
    %628 = vmatprep.subr.mxu0 0.0
    %629 = vmatpush1.msra.mxu0 0.0
    %630 = vmatprep.subr.mxu0 0.0
    %631 = vmatpush1.msra.mxu0 0.0
    %632 = vmatprep.mubr.f32.mxu0 0.0
    %633 = vmatmul.mubr.f32.gmra.mrb[0].mxu0 %v567
    %v634 = vpop.f32.mrb[0].mxu0
    %v635 = vadd.f32 %v394, %v634
    %v636 = vpop.f32.mrb[0].mxu0
    %v637 = vadd.f32 %v398, %v636
    %638 = vdwg.mxu0
    %639 = vmatprep.subr.mxu0 0.0
    %640 = vmatpush1.msra.mxu0 %v343
    %641 = vmatprep.subr.mxu0 0.0
    %642 = vmatpush1.msra.mxu0 %v346
    %643 = vmatprep.subr.mxu0 0.0
    %644 = vmatpush1.msra.mxu0 %v349
    %645 = vmatprep.subr.mxu0 0.0
    %646 = vmatpush1.msra.mxu0 %v352
    %647 = vmatprep.subr.mxu0 0.0
    %648 = vmatpush1.msra.mxu0 %v355
    %649 = vmatprep.subr.mxu0 0.0
    %650 = vmatpush1.msra.mxu0 %v358
    %651 = vmatprep.subr.mxu0 0.0
    %652 = vmatpush1.msra.mxu0 %v361
    %653 = vmatprep.subr.mxu0 0.0
    %654 = vmatpush1.msra.mxu0 %v364
    %655 = vmatprep.subr.mxu0 0.0
    %656 = vmatpush1.msra.mxu0 %v367
    %657 = vmatprep.subr.mxu0 0.0
    %658 = vmatpush1.msra.mxu0 %v370
    %659 = vmatprep.subr.mxu0 0.0
    %660 = vmatpush1.msra.mxu0 %v373
    %661 = vmatprep.subr.mxu0 0.0
    %662 = vmatpush1.msra.mxu0 %v376
    %663 = vmatprep.subr.mxu0 0.0
    %664 = vmatpush1.msra.mxu0 %v379
    %665 = vmatprep.subr.mxu0 0.0
    %666 = vmatpush1.msra.mxu0 %v382
    %667 = vmatprep.subr.mxu0 0.0
    %668 = vmatpush1.msra.mxu0 %v385
    %669 = vmatprep.subr.mxu0 0.0
    %670 = vmatpush1.msra.mxu0 %v388
    %671 = vmatprep.subr.mxu0 0.0
    %672 = vmatpush1.msra.mxu0 0.0
    %673 = vmatprep.subr.mxu0 0.0
    %674 = vmatpush1.msra.mxu0 0.0
    %675 = vmatprep.subr.mxu0 0.0
    %676 = vmatpush1.msra.mxu0 0.0
    %677 = vmatprep.subr.mxu0 0.0
    %678 = vmatpush1.msra.mxu0 0.0
    %679 = vmatprep.subr.mxu0 0.0
    %680 = vmatpush1.msra.mxu0 0.0
    %681 = vmatprep.subr.mxu0 0.0
    %682 = vmatpush1.msra.mxu0 0.0
    %683 = vmatprep.subr.mxu0 0.0
    %684 = vmatpush1.msra.mxu0 0.0
    %685 = vmatprep.subr.mxu0 0.0
    %686 = vmatpush1.msra.mxu0 0.0
    %687 = vmatprep.subr.mxu0 0.0
    %688 = vmatpush1.msra.mxu0 0.0
    %689 = vmatprep.subr.mxu0 0.0
    %690 = vmatpush1.msra.mxu0 0.0
    %691 = vmatprep.subr.mxu0 0.0
    %692 = vmatpush1.msra.mxu0 0.0
    %693 = vmatprep.subr.mxu0 0.0
    %694 = vmatpush1.msra.mxu0 0.0
    %695 = vmatprep.subr.mxu0 0.0
    %696 = vmatpush1.msra.mxu0 0.0
    %697 = vmatprep.subr.mxu0 0.0
    %698 = vmatpush1.msra.mxu0 0.0
    %699 = vmatprep.subr.mxu0 0.0
    %700 = vmatpush1.msra.mxu0 0.0
    %701 = vmatprep.subr.mxu0 0.0
    %702 = vmatpush1.msra.mxu0 0.0
    %703 = vmatprep.mubr.f32.mxu0 0.0
    %704 = vmatmul.mubr.f32.gmra.mrb[0].mxu0 %v567
    %v705 = vpop.f32.mrb[0].mxu0
    %v706 = vadd.f32 %v402, %v705
    %v707 = vpop.f32.mrb[0].mxu0
    %708 = vdwg.mxu0
    %v709 = vadd.f32 %v196, %v635
    %v710 = vadd.f32 %v198, %v637
    %v711 = vxor.u32 %v709, 2147483648
    %v712 = vxor.u32 %v710, 2147483648
    %v713 = vmul.f32 %v711, 1.442695
    %v714 = vpow.pop %v713
    %v715 = vmul.f32 %v712, 1.442695
    %v716 = vpow.pop %v715
    %v717 = vadd.f32 %v714, 1.0
    %v718 = vadd.f32 %v716, 1.0
    %v719 = vrcp.pop %v717
    %v720 = vmul.f32 1.0, %v719
    %v721 = vrcp.pop %v718
    %v722 = vmul.f32 1.0, %v721
    %v723 = vmul.f32 %v720, %v706
    %v724 = vadd.f32 %v308, %v723
    %v725 = vtanh.pop %v724
    %v726 = vsub.f32 1.0, %v722
    %v727 = vmul.f32 %v726, %v725
    %v728 = vmul.f32 %v722, %v567
    %v729 = vadd.f32 %v727, %v728
    %730 = vmatprep.subr.mxu0 %v342
    %731 = vmatpush1.msra.mxu0 %v341
    %732 = vmatprep.subr.mxu0 %v345
    %733 = vmatpush1.msra.mxu0 %v344
    %734 = vmatprep.subr.mxu0 %v348
    %735 = vmatpush1.msra.mxu0 %v347
    %736 = vmatprep.subr.mxu0 %v351
    %737 = vmatpush1.msra.mxu0 %v350
    %738 = vmatprep.subr.mxu0 %v354
    %739 = vmatpush1.msra.mxu0 %v353
    %740 = vmatprep.subr.mxu0 %v357
    %741 = vmatpush1.msra.mxu0 %v356
    %742 = vmatprep.subr.mxu0 %v360
    %743 = vmatpush1.msra.mxu0 %v359
    %744 = vmatprep.subr.mxu0 %v363
    %745 = vmatpush1.msra.mxu0 %v362
    %746 = vmatprep.subr.mxu0 %v366
    %747 = vmatpush1.msra.mxu0 %v365
    %748 = vmatprep.subr.mxu0 %v369
    %749 = vmatpush1.msra.mxu0 %v368
    %750 = vmatprep.subr.mxu0 %v372
    %751 = vmatpush1.msra.mxu0 %v371
    %752 = vmatprep.subr.mxu0 %v375
    %753 = vmatpush1.msra.mxu0 %v374
    %754 = vmatprep.subr.mxu0 %v378
    %755 = vmatpush1.msra.mxu0 %v377
    %756 = vmatprep.subr.mxu0 %v381
    %757 = vmatpush1.msra.mxu0 %v380
    %758 = vmatprep.subr.mxu0 %v384
    %759 = vmatpush1.msra.mxu0 %v383
    %760 = vmatprep.subr.mxu0 %v387
    %761 = vmatpush1.msra.mxu0 %v386
    %762 = vmatprep.subr.mxu0 0.0
    %763 = vmatpush1.msra.mxu0 0.0
    %764 = vmatprep.subr.mxu0 0.0
    %765 = vmatpush1.msra.mxu0 0.0
    %766 = vmatprep.subr.mxu0 0.0
    %767 = vmatpush1.msra.mxu0 0.0
    %768 = vmatprep.subr.mxu0 0.0
    %769 = vmatpush1.msra.mxu0 0.0
    %770 = vmatprep.subr.mxu0 0.0
    %771 = vmatpush1.msra.mxu0 0.0
    %772 = vmatprep.subr.mxu0 0.0
    %773 = vmatpush1.msra.mxu0 0.0
    %774 = vmatprep.subr.mxu0 0.0
    %775 = vmatpush1.msra.mxu0 0.0
    %776 = vmatprep.subr.mxu0 0.0
    %777 = vmatpush1.msra.mxu0 0.0
    %778 = vmatprep.subr.mxu0 0.0
    %779 = vmatpush1.msra.mxu0 0.0
    %780 = vmatprep.subr.mxu0 0.0
    %781 = vmatpush1.msra.mxu0 0.0
    %782 = vmatprep.subr.mxu0 0.0
    %783 = vmatpush1.msra.mxu0 0.0
    %784 = vmatprep.subr.mxu0 0.0
    %785 = vmatpush1.msra.mxu0 0.0
    %786 = vmatprep.subr.mxu0 0.0
    %787 = vmatpush1.msra.mxu0 0.0
    %788 = vmatprep.subr.mxu0 0.0
    %789 = vmatpush1.msra.mxu0 0.0
    %790 = vmatprep.subr.mxu0 0.0
    %791 = vmatpush1.msra.mxu0 0.0
    %792 = vmatprep.subr.mxu0 0.0
    %793 = vmatpush1.msra.mxu0 0.0
    %794 = vmatprep.mubr.f32.mxu0 0.0
    %795 = vmatmul.mubr.f32.gmra.mrb[0].mxu0 %v729
    %v796 = vpop.f32.mrb[0].mxu0
    %v797 = vadd.f32 %v394, %v796
    %v798 = vpop.f32.mrb[0].mxu0
    %v799 = vadd.f32 %v398, %v798
    %800 = vdwg.mxu0
    %801 = vmatprep.subr.mxu0 0.0
    %802 = vmatpush1.msra.mxu0 %v343
    %803 = vmatprep.subr.mxu0 0.0
    %804 = vmatpush1.msra.mxu0 %v346
    %805 = vmatprep.subr.mxu0 0.0
    %806 = vmatpush1.msra.mxu0 %v349
    %807 = vmatprep.subr.mxu0 0.0
    %808 = vmatpush1.msra.mxu0 %v352
    %809 = vmatprep.subr.mxu0 0.0
    %810 = vmatpush1.msra.mxu0 %v355
    %811 = vmatprep.subr.mxu0 0.0
    %812 = vmatpush1.msra.mxu0 %v358
    %813 = vmatprep.subr.mxu0 0.0
    %814 = vmatpush1.msra.mxu0 %v361
    %815 = vmatprep.subr.mxu0 0.0
    %816 = vmatpush1.msra.mxu0 %v364
    %817 = vmatprep.subr.mxu0 0.0
    %818 = vmatpush1.msra.mxu0 %v367
    %819 = vmatprep.subr.mxu0 0.0
    %820 = vmatpush1.msra.mxu0 %v370
    %821 = vmatprep.subr.mxu0 0.0
    %822 = vmatpush1.msra.mxu0 %v373
    %823 = vmatprep.subr.mxu0 0.0
    %824 = vmatpush1.msra.mxu0 %v376
    %825 = vmatprep.subr.mxu0 0.0
    %826 = vmatpush1.msra.mxu0 %v379
    %827 = vmatprep.subr.mxu0 0.0
    %828 = vmatpush1.msra.mxu0 %v382
    %829 = vmatprep.subr.mxu0 0.0
    %830 = vmatpush1.msra.mxu0 %v385
    %831 = vmatprep.subr.mxu0 0.0
    %832 = vmatpush1.msra.mxu0 %v388
    %833 = vmatprep.subr.mxu0 0.0
    %834 = vmatpush1.msra.mxu0 0.0
    %835 = vmatprep.subr.mxu0 0.0
    %836 = vmatpush1.msra.mxu0 0.0
    %837 = vmatprep.subr.mxu0 0.0
    %838 = vmatpush1.msra.mxu0 0.0
    %839 = vmatprep.subr.mxu0 0.0
    %840 = vmatpush1.msra.mxu0 0.0
    %841 = vmatprep.subr.mxu0 0.0
    %842 = vmatpush1.msra.mxu0 0.0
    %843 = vmatprep.subr.mxu0 0.0
    %844 = vmatpush1.msra.mxu0 0.0
    %845 = vmatprep.subr.mxu0 0.0
    %846 = vmatpush1.msra.mxu0 0.0
    %847 = vmatprep.subr.mxu0 0.0
    %848 = vmatpush1.msra.mxu0 0.0
    %849 = vmatprep.subr.mxu0 0.0
    %850 = vmatpush1.msra.mxu0 0.0
    %851 = vmatprep.subr.mxu0 0.0
    %852 = vmatpush1.msra.mxu0 0.0
    %853 = vmatprep.subr.mxu0 0.0
    %854 = vmatpush1.msra.mxu0 0.0
    %855 = vmatprep.subr.mxu0 0.0
    %856 = vmatpush1.msra.mxu0 0.0
    %857 = vmatprep.subr.mxu0 0.0
    %858 = vmatpush1.msra.mxu0 0.0
    %859 = vmatprep.subr.mxu0 0.0
    %860 = vmatpush1.msra.mxu0 0.0
    %861 = vmatprep.subr.mxu0 0.0
    %862 = vmatpush1.msra.mxu0 0.0
    %863 = vmatprep.subr.mxu0 0.0
    %864 = vmatpush1.msra.mxu0 0.0
    %865 = vmatprep.mubr.f32.mxu0 0.0
    %866 = vmatmul.mubr.f32.gmra.mrb[0].mxu0 %v729
    %v867 = vpop.f32.mrb[0].mxu0
    %v868 = vadd.f32 %v402, %v867
    %v869 = vpop.f32.mrb[0].mxu0
    %870 = vdwg.mxu0
    %v871 = vadd.f32 %v202, %v797
    %v872 = vadd.f32 %v204, %v799
    %v873 = vxor.u32 %v871, 2147483648
    %v874 = vxor.u32 %v872, 2147483648
    %v875 = vmul.f32 %v873, 1.442695
    %v876 = vpow.pop %v875
    %v877 = vmul.f32 %v874, 1.442695
    %v878 = vpow.pop %v877
    %v879 = vadd.f32 %v876, 1.0
    %v880 = vadd.f32 %v878, 1.0
    %v881 = vrcp.pop %v879
    %v882 = vmul.f32 1.0, %v881
    %v883 = vrcp.pop %v880
    %v884 = vmul.f32 1.0, %v883
    %v885 = vmul.f32 %v882, %v868
    %v886 = vadd.f32 %v313, %v885
    %v887 = vtanh.pop %v886
    %v888 = vsub.f32 1.0, %v884
    %v889 = vmul.f32 %v888, %v887
    %v890 = vmul.f32 %v884, %v729
    %v891 = vadd.f32 %v889, %v890
    %892 = vmatprep.subr.mxu0 %v342
    %893 = vmatpush1.msra.mxu0 %v341
    %894 = vmatprep.subr.mxu0 %v345
    %895 = vmatpush1.msra.mxu0 %v344
    %896 = vmatprep.subr.mxu0 %v348
    %897 = vmatpush1.msra.mxu0 %v347
    %898 = vmatprep.subr.mxu0 %v351
    %899 = vmatpush1.msra.mxu0 %v350
    %900 = vmatprep.subr.mxu0 %v354
    %901 = vmatpush1.msra.mxu0 %v353
    %902 = vmatprep.subr.mxu0 %v357
    %903 = vmatpush1.msra.mxu0 %v356
    %904 = vmatprep.subr.mxu0 %v360
    %905 = vmatpush1.msra.mxu0 %v359
    %906 = vmatprep.subr.mxu0 %v363
    %907 = vmatpush1.msra.mxu0 %v362
    %908 = vmatprep.subr.mxu0 %v366
    %909 = vmatpush1.msra.mxu0 %v365
    %910 = vmatprep.subr.mxu0 %v369
    %911 = vmatpush1.msra.mxu0 %v368
    %912 = vmatprep.subr.mxu0 %v372
    %913 = vmatpush1.msra.mxu0 %v371
    %914 = vmatprep.subr.mxu0 %v375
    %915 = vmatpush1.msra.mxu0 %v374
    %916 = vmatprep.subr.mxu0 %v378
    %917 = vmatpush1.msra.mxu0 %v377
    %918 = vmatprep.subr.mxu0 %v381
    %919 = vmatpush1.msra.mxu0 %v380
    %920 = vmatprep.subr.mxu0 %v384
    %921 = vmatpush1.msra.mxu0 %v383
    %922 = vmatprep.subr.mxu0 %v387
    %923 = vmatpush1.msra.mxu0 %v386
    %924 = vmatprep.subr.mxu0 0.0
    %925 = vmatpush1.msra.mxu0 0.0
    %926 = vmatprep.subr.mxu0 0.0
    %927 = vmatpush1.msra.mxu0 0.0
    %928 = vmatprep.subr.mxu0 0.0
    %929 = vmatpush1.msra.mxu0 0.0
    %930 = vmatprep.subr.mxu0 0.0
    %931 = vmatpush1.msra.mxu0 0.0
    %932 = vmatprep.subr.mxu0 0.0
    %933 = vmatpush1.msra.mxu0 0.0
    %934 = vmatprep.subr.mxu0 0.0
    %935 = vmatpush1.msra.mxu0 0.0
    %936 = vmatprep.subr.mxu0 0.0
    %937 = vmatpush1.msra.mxu0 0.0
    %938 = vmatprep.subr.mxu0 0.0
    %939 = vmatpush1.msra.mxu0 0.0
    %940 = vmatprep.subr.mxu0 0.0
    %941 = vmatpush1.msra.mxu0 0.0
    %942 = vmatprep.subr.mxu0 0.0
    %943 = vmatpush1.msra.mxu0 0.0
    %944 = vmatprep.subr.mxu0 0.0
    %945 = vmatpush1.msra.mxu0 0.0
    %946 = vmatprep.subr.mxu0 0.0
    %947 = vmatpush1.msra.mxu0 0.0
    %948 = vmatprep.subr.mxu0 0.0
    %949 = vmatpush1.msra.mxu0 0.0
    %950 = vmatprep.subr.mxu0 0.0
    %951 = vmatpush1.msra.mxu0 0.0
    %952 = vmatprep.subr.mxu0 0.0
    %953 = vmatpush1.msra.mxu0 0.0
    %954 = vmatprep.subr.mxu0 0.0
    %955 = vmatpush1.msra.mxu0 0.0
    %956 = vmatprep.mubr.f32.mxu0 0.0
    %957 = vmatmul.mubr.f32.gmra.mrb[0].mxu0 %v891
    %v958 = vpop.f32.mrb[0].mxu0
    %v959 = vadd.f32 %v394, %v958
    %v960 = vpop.f32.mrb[0].mxu0
    %v961 = vadd.f32 %v398, %v960
    %962 = vdwg.mxu0
    %963 = vmatprep.subr.mxu0 0.0
    %964 = vmatpush1.msra.mxu0 %v343
    %965 = vmatprep.subr.mxu0 0.0
    %966 = vmatpush1.msra.mxu0 %v346
    %967 = vmatprep.subr.mxu0 0.0
    %968 = vmatpush1.msra.mxu0 %v349
    %969 = vmatprep.subr.mxu0 0.0
    %970 = vmatpush1.msra.mxu0 %v352
    %971 = vmatprep.subr.mxu0 0.0
    %972 = vmatpush1.msra.mxu0 %v355
    %973 = vmatprep.subr.mxu0 0.0
    %974 = vmatpush1.msra.mxu0 %v358
    %975 = vmatprep.subr.mxu0 0.0
    %976 = vmatpush1.msra.mxu0 %v361
    %977 = vmatprep.subr.mxu0 0.0
    %978 = vmatpush1.msra.mxu0 %v364
    %979 = vmatprep.subr.mxu0 0.0
    %980 = vmatpush1.msra.mxu0 %v367
    %981 = vmatprep.subr.mxu0 0.0
    %982 = vmatpush1.msra.mxu0 %v370
    %983 = vmatprep.subr.mxu0 0.0
    %984 = vmatpush1.msra.mxu0 %v373
    %985 = vmatprep.subr.mxu0 0.0
    %986 = vmatpush1.msra.mxu0 %v376
    %987 = vmatprep.subr.mxu0 0.0
    %988 = vmatpush1.msra.mxu0 %v379
    %989 = vmatprep.subr.mxu0 0.0
    %990 = vmatpush1.msra.mxu0 %v382
    %991 = vmatprep.subr.mxu0 0.0
    %992 = vmatpush1.msra.mxu0 %v385
    %993 = vmatprep.subr.mxu0 0.0
    %994 = vmatpush1.msra.mxu0 %v388
    %995 = vmatprep.subr.mxu0 0.0
    %996 = vmatpush1.msra.mxu0 0.0
    %997 = vmatprep.subr.mxu0 0.0
    %998 = vmatpush1.msra.mxu0 0.0
    %999 = vmatprep.subr.mxu0 0.0
    %1000 = vmatpush1.msra.mxu0 0.0
    %1001 = vmatprep.subr.mxu0 0.0
    %1002 = vmatpush1.msra.mxu0 0.0
    %1003 = vmatprep.subr.mxu0 0.0
    %1004 = vmatpush1.msra.mxu0 0.0
    %1005 = vmatprep.subr.mxu0 0.0
    %1006 = vmatpush1.msra.mxu0 0.0
    %1007 = vmatprep.subr.mxu0 0.0
    %1008 = vmatpush1.msra.mxu0 0.0
    %1009 = vmatprep.subr.mxu0 0.0
    %1010 = vmatpush1.msra.mxu0 0.0
    %1011 = vmatprep.subr.mxu0 0.0
    %1012 = vmatpush1.msra.mxu0 0.0
    %1013 = vmatprep.subr.mxu0 0.0
    %1014 = vmatpush1.msra.mxu0 0.0
    %1015 = vmatprep.subr.mxu0 0.0
    %1016 = vmatpush1.msra.mxu0 0.0
    %1017 = vmatprep.subr.mxu0 0.0
    %1018 = vmatpush1.msra.mxu0 0.0
    %1019 = vmatprep.subr.mxu0 0.0
    %1020 = vmatpush1.msra.mxu0 0.0
    %1021 = vmatprep.subr.mxu0 0.0
    %1022 = vmatpush1.msra.mxu0 0.0
    %1023 = vmatprep.subr.mxu0 0.0
    %1024 = vmatpush1.msra.mxu0 0.0
    %1025 = vmatprep.subr.mxu0 0.0
    %1026 = vmatpush1.msra.mxu0 0.0
    %1027 = vmatprep.mubr.f32.mxu0 0.0
    %1028 = vmatmul.mubr.f32.gmra.mrb[0].mxu0 %v891
    %v1029 = vpop.f32.mrb[0].mxu0
    %v1030 = vadd.f32 %v402, %v1029
    %v1031 = vpop.f32.mrb[0].mxu0
    %1032 = vdwg.mxu0
    %v1033 = vadd.f32 %v208, %v959
    %v1034 = vadd.f32 %v210, %v961
    %v1035 = vxor.u32 %v1033, 2147483648
    %v1036 = vxor.u32 %v1034, 2147483648
    %v1037 = vmul.f32 %v1035, 1.442695
    %v1038 = vpow.pop %v1037
    %v1039 = vmul.f32 %v1036, 1.442695
    %v1040 = vpow.pop %v1039
    %v1041 = vadd.f32 %v1038, 1.0
    %v1042 = vadd.f32 %v1040, 1.0
    %v1043 = vrcp.pop %v1041
    %v1044 = vmul.f32 1.0, %v1043
    %v1045 = vrcp.pop %v1042
    %v1046 = vmul.f32 1.0, %v1045
    %v1047 = vmul.f32 %v1044, %v1030
    %v1048 = vadd.f32 %v318, %v1047
    %v1049 = vtanh.pop %v1048
    %v1050 = vsub.f32 1.0, %v1046
    %v1051 = vmul.f32 %v1050, %v1049
    %v1052 = vmul.f32 %v1046, %v891
    %v1053 = vadd.f32 %v1051, %v1052
    %1054 = vmatprep.subr.mxu0 %v342
    %1055 = vmatpush1.msra.mxu0 %v341
    %1056 = vmatprep.subr.mxu0 %v345
    %1057 = vmatpush1.msra.mxu0 %v344
    %1058 = vmatprep.subr.mxu0 %v348
    %1059 = vmatpush1.msra.mxu0 %v347
    %1060 = vmatprep.subr.mxu0 %v351
    %1061 = vmatpush1.msra.mxu0 %v350
    %1062 = vmatprep.subr.mxu0 %v354
    %1063 = vmatpush1.msra.mxu0 %v353
    %1064 = vmatprep.subr.mxu0 %v357
    %1065 = vmatpush1.msra.mxu0 %v356
    %1066 = vmatprep.subr.mxu0 %v360
    %1067 = vmatpush1.msra.mxu0 %v359
    %1068 = vmatprep.subr.mxu0 %v363
    %1069 = vmatpush1.msra.mxu0 %v362
    %1070 = vmatprep.subr.mxu0 %v366
    %1071 = vmatpush1.msra.mxu0 %v365
    %1072 = vmatprep.subr.mxu0 %v369
    %1073 = vmatpush1.msra.mxu0 %v368
    %1074 = vmatprep.subr.mxu0 %v372
    %1075 = vmatpush1.msra.mxu0 %v371
    %1076 = vmatprep.subr.mxu0 %v375
    %1077 = vmatpush1.msra.mxu0 %v374
    %1078 = vmatprep.subr.mxu0 %v378
    %1079 = vmatpush1.msra.mxu0 %v377
    %1080 = vmatprep.subr.mxu0 %v381
    %1081 = vmatpush1.msra.mxu0 %v380
    %1082 = vmatprep.subr.mxu0 %v384
    %1083 = vmatpush1.msra.mxu0 %v383
    %1084 = vmatprep.subr.mxu0 %v387
    %1085 = vmatpush1.msra.mxu0 %v386
    %1086 = vmatprep.subr.mxu0 0.0
    %1087 = vmatpush1.msra.mxu0 0.0
    %1088 = vmatprep.subr.mxu0 0.0
    %1089 = vmatpush1.msra.mxu0 0.0
    %1090 = vmatprep.subr.mxu0 0.0
    %1091 = vmatpush1.msra.mxu0 0.0
    %1092 = vmatprep.subr.mxu0 0.0
    %1093 = vmatpush1.msra.mxu0 0.0
    %1094 = vmatprep.subr.mxu0 0.0
    %1095 = vmatpush1.msra.mxu0 0.0
    %1096 = vmatprep.subr.mxu0 0.0
    %1097 = vmatpush1.msra.mxu0 0.0
    %1098 = vmatprep.subr.mxu0 0.0
    %1099 = vmatpush1.msra.mxu0 0.0
    %1100 = vmatprep.subr.mxu0 0.0
    %1101 = vmatpush1.msra.mxu0 0.0
    %1102 = vmatprep.subr.mxu0 0.0
    %1103 = vmatpush1.msra.mxu0 0.0
    %1104 = vmatprep.subr.mxu0 0.0
    %1105 = vmatpush1.msra.mxu0 0.0
    %1106 = vmatprep.subr.mxu0 0.0
    %1107 = vmatpush1.msra.mxu0 0.0
    %1108 = vmatprep.subr.mxu0 0.0
    %1109 = vmatpush1.msra.mxu0 0.0
    %1110 = vmatprep.subr.mxu0 0.0
    %1111 = vmatpush1.msra.mxu0 0.0
    %1112 = vmatprep.subr.mxu0 0.0
    %1113 = vmatpush1.msra.mxu0 0.0
    %1114 = vmatprep.subr.mxu0 0.0
    %1115 = vmatpush1.msra.mxu0 0.0
    %1116 = vmatprep.subr.mxu0 0.0
    %1117 = vmatpush1.msra.mxu0 0.0
    %1118 = vmatprep.mubr.f32.mxu0 0.0
    %1119 = vmatmul.mubr.f32.gmra.mrb[0].mxu0 %v1053
    %v1120 = vpop.f32.mrb[0].mxu0
    %v1121 = vadd.f32 %v394, %v1120
    %v1122 = vpop.f32.mrb[0].mxu0
    %v1123 = vadd.f32 %v398, %v1122
    %1124 = vdwg.mxu0
    %1125 = vmatprep.subr.mxu0 0.0
    %1126 = vmatpush1.msra.mxu0 %v343
    %1127 = vmatprep.subr.mxu0 0.0
    %1128 = vmatpush1.msra.mxu0 %v346
    %1129 = vmatprep.subr.mxu0 0.0
    %1130 = vmatpush1.msra.mxu0 %v349
    %1131 = vmatprep.subr.mxu0 0.0
    %1132 = vmatpush1.msra.mxu0 %v352
    %1133 = vmatprep.subr.mxu0 0.0
    %1134 = vmatpush1.msra.mxu0 %v355
    %1135 = vmatprep.subr.mxu0 0.0
    %1136 = vmatpush1.msra.mxu0 %v358
    %1137 = vmatprep.subr.mxu0 0.0
    %1138 = vmatpush1.msra.mxu0 %v361
    %1139 = vmatprep.subr.mxu0 0.0
    %1140 = vmatpush1.msra.mxu0 %v364
    %1141 = vmatprep.subr.mxu0 0.0
    %1142 = vmatpush1.msra.mxu0 %v367
    %1143 = vmatprep.subr.mxu0 0.0
    %1144 = vmatpush1.msra.mxu0 %v370
    %1145 = vmatprep.subr.mxu0 0.0
    %1146 = vmatpush1.msra.mxu0 %v373
    %1147 = vmatprep.subr.mxu0 0.0
    %1148 = vmatpush1.msra.mxu0 %v376
    %1149 = vmatprep.subr.mxu0 0.0
    %1150 = vmatpush1.msra.mxu0 %v379
    %1151 = vmatprep.subr.mxu0 0.0
    %1152 = vmatpush1.msra.mxu0 %v382
    %1153 = vmatprep.subr.mxu0 0.0
    %1154 = vmatpush1.msra.mxu0 %v385
    %1155 = vmatprep.subr.mxu0 0.0
    %1156 = vmatpush1.msra.mxu0 %v388
    %1157 = vmatprep.subr.mxu0 0.0
    %1158 = vmatpush1.msra.mxu0 0.0
    %1159 = vmatprep.subr.mxu0 0.0
    %1160 = vmatpush1.msra.mxu0 0.0
    %1161 = vmatprep.subr.mxu0 0.0
    %1162 = vmatpush1.msra.mxu0 0.0
    %1163 = vmatprep.subr.mxu0 0.0
    %1164 = vmatpush1.msra.mxu0 0.0
    %1165 = vmatprep.subr.mxu0 0.0
    %1166 = vmatpush1.msra.mxu0 0.0
    %1167 = vmatprep.subr.mxu0 0.0
    %1168 = vmatpush1.msra.mxu0 0.0
    %1169 = vmatprep.subr.mxu0 0.0
    %1170 = vmatpush1.msra.mxu0 0.0
    %1171 = vmatprep.subr.mxu0 0.0
    %1172 = vmatpush1.msra.mxu0 0.0
    %1173 = vmatprep.subr.mxu0 0.0
    %1174 = vmatpush1.msra.mxu0 0.0
    %1175 = vmatprep.subr.mxu0 0.0
    %1176 = vmatpush1.msra.mxu0 0.0
    %1177 = vmatprep.subr.mxu0 0.0
    %1178 = vmatpush1.msra.mxu0 0.0
    %1179 = vmatprep.subr.mxu0 0.0
    %1180 = vmatpush1.msra.mxu0 0.0
    %1181 = vmatprep.subr.mxu0 0.0
    %1182 = vmatpush1.msra.mxu0 0.0
    %1183 = vmatprep.subr.mxu0 0.0
    %1184 = vmatpush1.msra.mxu0 0.0
    %1185 = vmatprep.subr.mxu0 0.0
    %1186 = vmatpush1.msra.mxu0 0.0
    %1187 = vmatprep.subr.mxu0 0.0
    %1188 = vmatpush1.msra.mxu0 0.0
    %1189 = vmatprep.mubr.f32.mxu0 0.0
    %1190 = vmatmul.mubr.f32.gmra.mrb[0].mxu0 %v1053
    %v1191 = vpop.f32.mrb[0].mxu0
    %v1192 = vadd.f32 %v402, %v1191
    %v1193 = vpop.f32.mrb[0].mxu0
    %1194 = vdwg.mxu0
    %v1195 = vadd.f32 %v214, %v1121
    %v1196 = vadd.f32 %v216, %v1123
    %v1197 = vxor.u32 %v1195, 2147483648
    %v1198 = vxor.u32 %v1196, 2147483648
    %v1199 = vmul.f32 %v1197, 1.442695
    %v1200 = vpow.pop %v1199
    %v1201 = vmul.f32 %v1198, 1.442695
    %v1202 = vpow.pop %v1201
    %v1203 = vadd.f32 %v1200, 1.0
    %v1204 = vadd.f32 %v1202, 1.0
    %v1205 = vrcp.pop %v1203
    %v1206 = vmul.f32 1.0, %v1205
    %v1207 = vrcp.pop %v1204
    %v1208 = vmul.f32 1.0, %v1207
    %v1209 = vmul.f32 %v1206, %v1192
    %v1210 = vadd.f32 %v323, %v1209
    %v1211 = vtanh.pop %v1210
    %v1212 = vsub.f32 1.0, %v1208
    %v1213 = vmul.f32 %v1212, %v1211
    %v1214 = vmul.f32 %v1208, %v1053
    %v1215 = vadd.f32 %v1213, %v1214
    %1216 = vmatprep.subr.mxu0 %v342
    %1217 = vmatpush1.msra.mxu0 %v341
    %1218 = vmatprep.subr.mxu0 %v345
    %1219 = vmatpush1.msra.mxu0 %v344
    %1220 = vmatprep.subr.mxu0 %v348
    %1221 = vmatpush1.msra.mxu0 %v347
    %1222 = vmatprep.subr.mxu0 %v351
    %1223 = vmatpush1.msra.mxu0 %v350
    %1224 = vmatprep.subr.mxu0 %v354
    %1225 = vmatpush1.msra.mxu0 %v353
    %1226 = vmatprep.subr.mxu0 %v357
    %1227 = vmatpush1.msra.mxu0 %v356
    %1228 = vmatprep.subr.mxu0 %v360
    %1229 = vmatpush1.msra.mxu0 %v359
    %1230 = vmatprep.subr.mxu0 %v363
    %1231 = vmatpush1.msra.mxu0 %v362
    %1232 = vmatprep.subr.mxu0 %v366
    %1233 = vmatpush1.msra.mxu0 %v365
    %1234 = vmatprep.subr.mxu0 %v369
    %1235 = vmatpush1.msra.mxu0 %v368
    %1236 = vmatprep.subr.mxu0 %v372
    %1237 = vmatpush1.msra.mxu0 %v371
    %1238 = vmatprep.subr.mxu0 %v375
    %1239 = vmatpush1.msra.mxu0 %v374
    %1240 = vmatprep.subr.mxu0 %v378
    %1241 = vmatpush1.msra.mxu0 %v377
    %1242 = vmatprep.subr.mxu0 %v381
    %1243 = vmatpush1.msra.mxu0 %v380
    %1244 = vmatprep.subr.mxu0 %v384
    %1245 = vmatpush1.msra.mxu0 %v383
    %1246 = vmatprep.subr.mxu0 %v387
    %1247 = vmatpush1.msra.mxu0 %v386
    %1248 = vmatprep.subr.mxu0 0.0
    %1249 = vmatpush1.msra.mxu0 0.0
    %1250 = vmatprep.subr.mxu0 0.0
    %1251 = vmatpush1.msra.mxu0 0.0
    %1252 = vmatprep.subr.mxu0 0.0
    %1253 = vmatpush1.msra.mxu0 0.0
    %1254 = vmatprep.subr.mxu0 0.0
    %1255 = vmatpush1.msra.mxu0 0.0
    %1256 = vmatprep.subr.mxu0 0.0
    %1257 = vmatpush1.msra.mxu0 0.0
    %1258 = vmatprep.subr.mxu0 0.0
    %1259 = vmatpush1.msra.mxu0 0.0
    %1260 = vmatprep.subr.mxu0 0.0
    %1261 = vmatpush1.msra.mxu0 0.0
    %1262 = vmatprep.subr.mxu0 0.0
    %1263 = vmatpush1.msra.mxu0 0.0
    %1264 = vmatprep.subr.mxu0 0.0
    %1265 = vmatpush1.msra.mxu0 0.0
    %1266 = vmatprep.subr.mxu0 0.0
    %1267 = vmatpush1.msra.mxu0 0.0
    %1268 = vmatprep.subr.mxu0 0.0
    %1269 = vmatpush1.msra.mxu0 0.0
    %1270 = vmatprep.subr.mxu0 0.0
    %1271 = vmatpush1.msra.mxu0 0.0
    %1272 = vmatprep.subr.mxu0 0.0
    %1273 = vmatpush1.msra.mxu0 0.0
    %1274 = vmatprep.subr.mxu0 0.0
    %1275 = vmatpush1.msra.mxu0 0.0
    %1276 = vmatprep.subr.mxu0 0.0
    %1277 = vmatpush1.msra.mxu0 0.0
    %1278 = vmatprep.subr.mxu0 0.0
    %1279 = vmatpush1.msra.mxu0 0.0
    %1280 = vmatprep.mubr.f32.mxu0 0.0
    %1281 = vmatmul.mubr.f32.gmra.mrb[0].mxu0 %v1215
    %v1282 = vpop.f32.mrb[0].mxu0
    %v1283 = vadd.f32 %v394, %v1282
    %v1284 = vpop.f32.mrb[0].mxu0
    %v1285 = vadd.f32 %v398, %v1284
    %1286 = vdwg.mxu0
    %1287 = vmatprep.subr.mxu0 0.0
    %1288 = vmatpush1.msra.mxu0 %v343
    %1289 = vmatprep.subr.mxu0 0.0
    %1290 = vmatpush1.msra.mxu0 %v346
    %1291 = vmatprep.subr.mxu0 0.0
    %1292 = vmatpush1.msra.mxu0 %v349
    %1293 = vmatprep.subr.mxu0 0.0
    %1294 = vmatpush1.msra.mxu0 %v352
    %1295 = vmatprep.subr.mxu0 0.0
    %1296 = vmatpush1.msra.mxu0 %v355
    %1297 = vmatprep.subr.mxu0 0.0
    %1298 = vmatpush1.msra.mxu0 %v358
    %1299 = vmatprep.subr.mxu0 0.0
    %1300 = vmatpush1.msra.mxu0 %v361
    %1301 = vmatprep.subr.mxu0 0.0
    %1302 = vmatpush1.msra.mxu0 %v364
    %1303 = vmatprep.subr.mxu0 0.0
    %1304 = vmatpush1.msra.mxu0 %v367
    %1305 = vmatprep.subr.mxu0 0.0
    %1306 = vmatpush1.msra.mxu0 %v370
    %1307 = vmatprep.subr.mxu0 0.0
    %1308 = vmatpush1.msra.mxu0 %v373
    %1309 = vmatprep.subr.mxu0 0.0
    %1310 = vmatpush1.msra.mxu0 %v376
    %1311 = vmatprep.subr.mxu0 0.0
    %1312 = vmatpush1.msra.mxu0 %v379
    %1313 = vmatprep.subr.mxu0 0.0
    %1314 = vmatpush1.msra.mxu0 %v382
    %1315 = vmatprep.subr.mxu0 0.0
    %1316 = vmatpush1.msra.mxu0 %v385
    %1317 = vmatprep.subr.mxu0 0.0
    %1318 = vmatpush1.msra.mxu0 %v388
    %1319 = vmatprep.subr.mxu0 0.0
    %1320 = vmatpush1.msra.mxu0 0.0
    %1321 = vmatprep.subr.mxu0 0.0
    %1322 = vmatpush1.msra.mxu0 0.0
    %1323 = vmatprep.subr.mxu0 0.0
    %1324 = vmatpush1.msra.mxu0 0.0
    %1325 = vmatprep.subr.mxu0 0.0
    %1326 = vmatpush1.msra.mxu0 0.0
    %1327 = vmatprep.subr.mxu0 0.0
    %1328 = vmatpush1.msra.mxu0 0.0
    %1329 = vmatprep.subr.mxu0 0.0
    %1330 = vmatpush1.msra.mxu0 0.0
    %1331 = vmatprep.subr.mxu0 0.0
    %1332 = vmatpush1.msra.mxu0 0.0
    %1333 = vmatprep.subr.mxu0 0.0
    %1334 = vmatpush1.msra.mxu0 0.0
    %1335 = vmatprep.subr.mxu0 0.0
    %1336 = vmatpush1.msra.mxu0 0.0
    %1337 = vmatprep.subr.mxu0 0.0
    %1338 = vmatpush1.msra.mxu0 0.0
    %1339 = vmatprep.subr.mxu0 0.0
    %1340 = vmatpush1.msra.mxu0 0.0
    %1341 = vmatprep.subr.mxu0 0.0
    %1342 = vmatpush1.msra.mxu0 0.0
    %1343 = vmatprep.subr.mxu0 0.0
    %1344 = vmatpush1.msra.mxu0 0.0
    %1345 = vmatprep.subr.mxu0 0.0
    %1346 = vmatpush1.msra.mxu0 0.0
    %1347 = vmatprep.subr.mxu0 0.0
    %1348 = vmatpush1.msra.mxu0 0.0
    %1349 = vmatprep.subr.mxu0 0.0
    %1350 = vmatpush1.msra.mxu0 0.0
    %1351 = vmatprep.mubr.f32.mxu0 0.0
    %1352 = vmatmul.mubr.f32.gmra.mrb[0].mxu0 %v1215
    %v1353 = vpop.f32.mrb[0].mxu0
    %v1354 = vadd.f32 %v402, %v1353
    %v1355 = vpop.f32.mrb[0].mxu0
    %1356 = vdwg.mxu0
    %v1357 = vadd.f32 %v220, %v1283
    %v1358 = vadd.f32 %v222, %v1285
    %v1359 = vxor.u32 %v1357, 2147483648
    %v1360 = vxor.u32 %v1358, 2147483648
    %v1361 = vmul.f32 %v1359, 1.442695
    %v1362 = vpow.pop %v1361
    %v1363 = vmul.f32 %v1360, 1.442695
    %v1364 = vpow.pop %v1363
    %v1365 = vadd.f32 %v1362, 1.0
    %v1366 = vadd.f32 %v1364, 1.0
    %v1367 = vrcp.pop %v1365
    %v1368 = vmul.f32 1.0, %v1367
    %v1369 = vrcp.pop %v1366
    %v1370 = vmul.f32 1.0, %v1369
    %v1371 = vmul.f32 %v1368, %v1354
    %v1372 = vadd.f32 %v328, %v1371
    %v1373 = vtanh.pop %v1372
    %v1374 = vsub.f32 1.0, %v1370
    %v1375 = vmul.f32 %v1374, %v1373
    %v1376 = vmul.f32 %v1370, %v1215
    %v1377 = vadd.f32 %v1375, %v1376
    %1378 = vmatprep.subr.mxu0 %v342
    %1379 = vmatpush1.msra.mxu0 %v341
    %1380 = vmatprep.subr.mxu0 %v345
    %1381 = vmatpush1.msra.mxu0 %v344
    %1382 = vmatprep.subr.mxu0 %v348
    %1383 = vmatpush1.msra.mxu0 %v347
    %1384 = vmatprep.subr.mxu0 %v351
    %1385 = vmatpush1.msra.mxu0 %v350
    %1386 = vmatprep.subr.mxu0 %v354
    %1387 = vmatpush1.msra.mxu0 %v353
    %1388 = vmatprep.subr.mxu0 %v357
    %1389 = vmatpush1.msra.mxu0 %v356
    %1390 = vmatprep.subr.mxu0 %v360
    %1391 = vmatpush1.msra.mxu0 %v359
    %1392 = vmatprep.subr.mxu0 %v363
    %1393 = vmatpush1.msra.mxu0 %v362
    %1394 = vmatprep.subr.mxu0 %v366
    %1395 = vmatpush1.msra.mxu0 %v365
    %1396 = vmatprep.subr.mxu0 %v369
    %1397 = vmatpush1.msra.mxu0 %v368
    %1398 = vmatprep.subr.mxu0 %v372
    %1399 = vmatpush1.msra.mxu0 %v371
    %1400 = vmatprep.subr.mxu0 %v375
    %1401 = vmatpush1.msra.mxu0 %v374
    %1402 = vmatprep.subr.mxu0 %v378
    %1403 = vmatpush1.msra.mxu0 %v377
    %1404 = vmatprep.subr.mxu0 %v381
    %1405 = vmatpush1.msra.mxu0 %v380
    %1406 = vmatprep.subr.mxu0 %v384
    %1407 = vmatpush1.msra.mxu0 %v383
    %1408 = vmatprep.subr.mxu0 %v387
    %1409 = vmatpush1.msra.mxu0 %v386
    %1410 = vmatprep.subr.mxu0 0.0
    %1411 = vmatpush1.msra.mxu0 0.0
    %1412 = vmatprep.subr.mxu0 0.0
    %1413 = vmatpush1.msra.mxu0 0.0
    %1414 = vmatprep.subr.mxu0 0.0
    %1415 = vmatpush1.msra.mxu0 0.0
    %1416 = vmatprep.subr.mxu0 0.0
    %1417 = vmatpush1.msra.mxu0 0.0
    %1418 = vmatprep.subr.mxu0 0.0
    %1419 = vmatpush1.msra.mxu0 0.0
    %1420 = vmatprep.subr.mxu0 0.0
    %1421 = vmatpush1.msra.mxu0 0.0
    %1422 = vmatprep.subr.mxu0 0.0
    %1423 = vmatpush1.msra.mxu0 0.0
    %1424 = vmatprep.subr.mxu0 0.0
    %1425 = vmatpush1.msra.mxu0 0.0
    %1426 = vmatprep.subr.mxu0 0.0
    %1427 = vmatpush1.msra.mxu0 0.0
    %1428 = vmatprep.subr.mxu0 0.0
    %1429 = vmatpush1.msra.mxu0 0.0
    %1430 = vmatprep.subr.mxu0 0.0
    %1431 = vmatpush1.msra.mxu0 0.0
    %1432 = vmatprep.subr.mxu0 0.0
    %1433 = vmatpush1.msra.mxu0 0.0
    %1434 = vmatprep.subr.mxu0 0.0
    %1435 = vmatpush1.msra.mxu0 0.0
    %1436 = vmatprep.subr.mxu0 0.0
    %1437 = vmatpush1.msra.mxu0 0.0
    %1438 = vmatprep.subr.mxu0 0.0
    %1439 = vmatpush1.msra.mxu0 0.0
    %1440 = vmatprep.subr.mxu0 0.0
    %1441 = vmatpush1.msra.mxu0 0.0
    %1442 = vmatprep.mubr.f32.mxu0 0.0
    %1443 = vmatmul.mubr.f32.gmra.mrb[0].mxu0 %v1377
    %v1444 = vpop.f32.mrb[0].mxu0
    %v1445 = vadd.f32 %v394, %v1444
    %v1446 = vpop.f32.mrb[0].mxu0
    %v1447 = vadd.f32 %v398, %v1446
    %1448 = vdwg.mxu0
    %1449 = vmatprep.subr.mxu0 0.0
    %1450 = vmatpush1.msra.mxu0 %v343
    %1451 = vmatprep.subr.mxu0 0.0
    %1452 = vmatpush1.msra.mxu0 %v346
    %1453 = vmatprep.subr.mxu0 0.0
    %1454 = vmatpush1.msra.mxu0 %v349
    %1455 = vmatprep.subr.mxu0 0.0
    %1456 = vmatpush1.msra.mxu0 %v352
    %1457 = vmatprep.subr.mxu0 0.0
    %1458 = vmatpush1.msra.mxu0 %v355
    %1459 = vmatprep.subr.mxu0 0.0
    %1460 = vmatpush1.msra.mxu0 %v358
    %1461 = vmatprep.subr.mxu0 0.0
    %1462 = vmatpush1.msra.mxu0 %v361
    %1463 = vmatprep.subr.mxu0 0.0
    %1464 = vmatpush1.msra.mxu0 %v364
    %1465 = vmatprep.subr.mxu0 0.0
    %1466 = vmatpush1.msra.mxu0 %v367
    %1467 = vmatprep.subr.mxu0 0.0
    %1468 = vmatpush1.msra.mxu0 %v370
    %1469 = vmatprep.subr.mxu0 0.0
    %1470 = vmatpush1.msra.mxu0 %v373
    %1471 = vmatprep.subr.mxu0 0.0
    %1472 = vmatpush1.msra.mxu0 %v376
    %1473 = vmatprep.subr.mxu0 0.0
    %1474 = vmatpush1.msra.mxu0 %v379
    %1475 = vmatprep.subr.mxu0 0.0
    %1476 = vmatpush1.msra.mxu0 %v382
    %1477 = vmatprep.subr.mxu0 0.0
    %1478 = vmatpush1.msra.mxu0 %v385
    %1479 = vmatprep.subr.mxu0 0.0
    %1480 = vmatpush1.msra.mxu0 %v388
    %1481 = vmatprep.subr.mxu0 0.0
    %1482 = vmatpush1.msra.mxu0 0.0
    %1483 = vmatprep.subr.mxu0 0.0
    %1484 = vmatpush1.msra.mxu0 0.0
    %1485 = vmatprep.subr.mxu0 0.0
    %1486 = vmatpush1.msra.mxu0 0.0
    %1487 = vmatprep.subr.mxu0 0.0
    %1488 = vmatpush1.msra.mxu0 0.0
    %1489 = vmatprep.subr.mxu0 0.0
    %1490 = vmatpush1.msra.mxu0 0.0
    %1491 = vmatprep.subr.mxu0 0.0
    %1492 = vmatpush1.msra.mxu0 0.0
    %1493 = vmatprep.subr.mxu0 0.0
    %1494 = vmatpush1.msra.mxu0 0.0
    %1495 = vmatprep.subr.mxu0 0.0
    %1496 = vmatpush1.msra.mxu0 0.0
    %1497 = vmatprep.subr.mxu0 0.0
    %1498 = vmatpush1.msra.mxu0 0.0
    %1499 = vmatprep.subr.mxu0 0.0
    %1500 = vmatpush1.msra.mxu0 0.0
    %1501 = vmatprep.subr.mxu0 0.0
    %1502 = vmatpush1.msra.mxu0 0.0
    %1503 = vmatprep.subr.mxu0 0.0
    %1504 = vmatpush1.msra.mxu0 0.0
    %1505 = vmatprep.subr.mxu0 0.0
    %1506 = vmatpush1.msra.mxu0 0.0
    %1507 = vmatprep.subr.mxu0 0.0
    %1508 = vmatpush1.msra.mxu0 0.0
    %1509 = vmatprep.subr.mxu0 0.0
    %1510 = vmatpush1.msra.mxu0 0.0
    %1511 = vmatprep.subr.mxu0 0.0
    %1512 = vmatpush1.msra.mxu0 0.0
    %1513 = vmatprep.mubr.f32.mxu0 0.0
    %1514 = vmatmul.mubr.f32.gmra.mrb[0].mxu0 %v1377
    %v1515 = vpop.f32.mrb[0].mxu0
    %v1516 = vadd.f32 %v402, %v1515
    %v1517 = vpop.f32.mrb[0].mxu0
    %1518 = vdwg.mxu0
    %v1519 = vadd.f32 %v226, %v1445
    %v1520 = vadd.f32 %v228, %v1447
    %v1521 = vxor.u32 %v1519, 2147483648
    %v1522 = vxor.u32 %v1520, 2147483648
    %v1523 = vmul.f32 %v1521, 1.442695
    %v1524 = vpow.pop %v1523
    %v1525 = vmul.f32 %v1522, 1.442695
    %v1526 = vpow.pop %v1525
    %v1527 = vadd.f32 %v1524, 1.0
    %v1528 = vadd.f32 %v1526, 1.0
    %v1529 = vrcp.pop %v1527
    %v1530 = vmul.f32 1.0, %v1529
    %v1531 = vrcp.pop %v1528
    %v1532 = vmul.f32 1.0, %v1531
    %v1533 = vmul.f32 %v1530, %v1516
    %v1534 = vadd.f32 %v333, %v1533
    %v1535 = vtanh.pop %v1534
    %v1536 = vsub.f32 1.0, %v1532
    %v1537 = vmul.f32 %v1536, %v1535
    %v1538 = vmul.f32 %v1532, %v1377
    %v1539 = vadd.f32 %v1537, %v1538
    %1540 = vmatprep.subr.mxu0 %v342
    %1541 = vmatpush1.msra.mxu0 %v341
    %1542 = vmatprep.subr.mxu0 %v345
    %1543 = vmatpush1.msra.mxu0 %v344
    %1544 = vmatprep.subr.mxu0 %v348
    %1545 = vmatpush1.msra.mxu0 %v347
    %1546 = vmatprep.subr.mxu0 %v351
    %1547 = vmatpush1.msra.mxu0 %v350
    %1548 = vmatprep.subr.mxu0 %v354
    %1549 = vmatpush1.msra.mxu0 %v353
    %1550 = vmatprep.subr.mxu0 %v357
    %1551 = vmatpush1.msra.mxu0 %v356
    %1552 = vmatprep.subr.mxu0 %v360
    %1553 = vmatpush1.msra.mxu0 %v359
    %1554 = vmatprep.subr.mxu0 %v363
    %1555 = vmatpush1.msra.mxu0 %v362
    %1556 = vmatprep.subr.mxu0 %v366
    %1557 = vmatpush1.msra.mxu0 %v365
    %1558 = vmatprep.subr.mxu0 %v369
    %1559 = vmatpush1.msra.mxu0 %v368
    %1560 = vmatprep.subr.mxu0 %v372
    %1561 = vmatpush1.msra.mxu0 %v371
    %1562 = vmatprep.subr.mxu0 %v375
    %1563 = vmatpush1.msra.mxu0 %v374
    %1564 = vmatprep.subr.mxu0 %v378
    %1565 = vmatpush1.msra.mxu0 %v377
    %1566 = vmatprep.subr.mxu0 %v381
    %1567 = vmatpush1.msra.mxu0 %v380
    %1568 = vmatprep.subr.mxu0 %v384
    %1569 = vmatpush1.msra.mxu0 %v383
    %1570 = vmatprep.subr.mxu0 %v387
    %1571 = vmatpush1.msra.mxu0 %v386
    %1572 = vmatprep.subr.mxu0 0.0
    %1573 = vmatpush1.msra.mxu0 0.0
    %1574 = vmatprep.subr.mxu0 0.0
    %1575 = vmatpush1.msra.mxu0 0.0
    %1576 = vmatprep.subr.mxu0 0.0
    %1577 = vmatpush1.msra.mxu0 0.0
    %1578 = vmatprep.subr.mxu0 0.0
    %1579 = vmatpush1.msra.mxu0 0.0
    %1580 = vmatprep.subr.mxu0 0.0
    %1581 = vmatpush1.msra.mxu0 0.0
    %1582 = vmatprep.subr.mxu0 0.0
    %1583 = vmatpush1.msra.mxu0 0.0
    %1584 = vmatprep.subr.mxu0 0.0
    %1585 = vmatpush1.msra.mxu0 0.0
    %1586 = vmatprep.subr.mxu0 0.0
    %1587 = vmatpush1.msra.mxu0 0.0
    %1588 = vmatprep.subr.mxu0 0.0
    %1589 = vmatpush1.msra.mxu0 0.0
    %1590 = vmatprep.subr.mxu0 0.0
    %1591 = vmatpush1.msra.mxu0 0.0
    %1592 = vmatprep.subr.mxu0 0.0
    %1593 = vmatpush1.msra.mxu0 0.0
    %1594 = vmatprep.subr.mxu0 0.0
    %1595 = vmatpush1.msra.mxu0 0.0
    %1596 = vmatprep.subr.mxu0 0.0
    %1597 = vmatpush1.msra.mxu0 0.0
    %1598 = vmatprep.subr.mxu0 0.0
    %1599 = vmatpush1.msra.mxu0 0.0
    %1600 = vmatprep.subr.mxu0 0.0
    %1601 = vmatpush1.msra.mxu0 0.0
    %1602 = vmatprep.subr.mxu0 0.0
    %1603 = vmatpush1.msra.mxu0 0.0
    %1604 = vmatprep.mubr.f32.mxu0 0.0
    %1605 = vmatmul.mubr.f32.gmra.mrb[0].mxu0 %v1539
    %v1606 = vpop.f32.mrb[0].mxu0
    %v1607 = vadd.f32 %v394, %v1606
    %v1608 = vpop.f32.mrb[0].mxu0
    %v1609 = vadd.f32 %v398, %v1608
    %1610 = vdwg.mxu0
    %1611 = vmatprep.subr.mxu0 0.0
    %1612 = vmatpush1.msra.mxu0 %v343
    %1613 = vmatprep.subr.mxu0 0.0
    %1614 = vmatpush1.msra.mxu0 %v346
    %1615 = vmatprep.subr.mxu0 0.0
    %1616 = vmatpush1.msra.mxu0 %v349
    %1617 = vmatprep.subr.mxu0 0.0
    %1618 = vmatpush1.msra.mxu0 %v352
    %1619 = vmatprep.subr.mxu0 0.0
    %1620 = vmatpush1.msra.mxu0 %v355
    %1621 = vmatprep.subr.mxu0 0.0
    %1622 = vmatpush1.msra.mxu0 %v358
    %1623 = vmatprep.subr.mxu0 0.0
    %1624 = vmatpush1.msra.mxu0 %v361
    %1625 = vmatprep.subr.mxu0 0.0
    %1626 = vmatpush1.msra.mxu0 %v364
    %1627 = vmatprep.subr.mxu0 0.0
    %1628 = vmatpush1.msra.mxu0 %v367
    %1629 = vmatprep.subr.mxu0 0.0
    %1630 = vmatpush1.msra.mxu0 %v370
    %1631 = vmatprep.subr.mxu0 0.0
    %1632 = vmatpush1.msra.mxu0 %v373
    %1633 = vmatprep.subr.mxu0 0.0
    %1634 = vmatpush1.msra.mxu0 %v376
    %1635 = vmatprep.subr.mxu0 0.0
    %1636 = vmatpush1.msra.mxu0 %v379
    %1637 = vmatprep.subr.mxu0 0.0
    %1638 = vmatpush1.msra.mxu0 %v382
    %1639 = vmatprep.subr.mxu0 0.0
    %1640 = vmatpush1.msra.mxu0 %v385
    %1641 = vmatprep.subr.mxu0 0.0
    %1642 = vmatpush1.msra.mxu0 %v388
    %1643 = vmatprep.subr.mxu0 0.0
    %1644 = vmatpush1.msra.mxu0 0.0
    %1645 = vmatprep.subr.mxu0 0.0
    %1646 = vmatpush1.msra.mxu0 0.0
    %1647 = vmatprep.subr.mxu0 0.0
    %1648 = vmatpush1.msra.mxu0 0.0
    %1649 = vmatprep.subr.mxu0 0.0
    %1650 = vmatpush1.msra.mxu0 0.0
    %1651 = vmatprep.subr.mxu0 0.0
    %1652 = vmatpush1.msra.mxu0 0.0
    %1653 = vmatprep.subr.mxu0 0.0
    %1654 = vmatpush1.msra.mxu0 0.0
    %1655 = vmatprep.subr.mxu0 0.0
    %1656 = vmatpush1.msra.mxu0 0.0
    %1657 = vmatprep.subr.mxu0 0.0
    %1658 = vmatpush1.msra.mxu0 0.0
    %1659 = vmatprep.subr.mxu0 0.0
    %1660 = vmatpush1.msra.mxu0 0.0
    %1661 = vmatprep.subr.mxu0 0.0
    %1662 = vmatpush1.msra.mxu0 0.0
    %1663 = vmatprep.subr.mxu0 0.0
    %1664 = vmatpush1.msra.mxu0 0.0
    %1665 = vmatprep.subr.mxu0 0.0
    %1666 = vmatpush1.msra.mxu0 0.0
    %1667 = vmatprep.subr.mxu0 0.0
    %1668 = vmatpush1.msra.mxu0 0.0
    %1669 = vmatprep.subr.mxu0 0.0
    %1670 = vmatpush1.msra.mxu0 0.0
    %1671 = vmatprep.subr.mxu0 0.0
    %1672 = vmatpush1.msra.mxu0 0.0
    %1673 = vmatprep.subr.mxu0 0.0
    %1674 = vmatpush1.msra.mxu0 0.0
    %1675 = vmatprep.mubr.f32.mxu0 0.0
    %1676 = vmatmul.mubr.f32.gmra.mrb[0].mxu0 %v1539
    %v1677 = vpop.f32.mrb[0].mxu0
    %v1678 = vadd.f32 %v402, %v1677
    %v1679 = vpop.f32.mrb[0].mxu0
    %1680 = vdwg.mxu0
    %v1681 = vadd.f32 %v232, %v1607
    %v1682 = vadd.f32 %v234, %v1609
    %v1683 = vxor.u32 %v1681, 2147483648
    %v1684 = vxor.u32 %v1682, 2147483648
    %v1685 = vmul.f32 %v1683, 1.442695
    %v1686 = vpow.pop %v1685
    %v1687 = vmul.f32 %v1684, 1.442695
    %v1688 = vpow.pop %v1687
    %v1689 = vadd.f32 %v1686, 1.0
    %v1690 = vadd.f32 %v1688, 1.0
    %v1691 = vrcp.pop %v1689
    %v1692 = vmul.f32 1.0, %v1691
    %v1693 = vrcp.pop %v1690
    %v1694 = vmul.f32 1.0, %v1693
    %v1695 = vmul.f32 %v1692, %v1678
    %v1696 = vadd.f32 %v338, %v1695
    %v1697 = vtanh.pop %v1696
    %v1698 = vsub.f32 1.0, %v1694
    %v1699 = vmul.f32 %v1698, %v1697
    %v1700 = vmul.f32 %v1694, %v1539
    %v1701 = vadd.f32 %v1699, %v1700
    %v1702 = vld [vmem:[#allocation5] sm:$0xff]
    %v1703 = vld [vmem:[#allocation5 + $0x8] sm:$0xff]
    %v1704 = vld [vmem:[#allocation5 + $0x10] sm:$0xff]
    %v1705 = vld [vmem:[#allocation5 + $0x18] sm:$0xff]
    %v1706 = vld [vmem:[#allocation5 + $0x20] sm:$0xff]
    %v1707 = vld [vmem:[#allocation5 + $0x28] sm:$0xff]
    %v1708 = vld [vmem:[#allocation5 + $0x30] sm:$0xff]
    %v1709 = vld [vmem:[#allocation5 + $0x38] sm:$0xff]
    %v1710 = vld [vmem:[#allocation5 + $0x40] sm:$0xff]
    %v1711 = vld [vmem:[#allocation5 + $0x48] sm:$0xff]
    %v1712 = vld [vmem:[#allocation5 + $0x50] sm:$0xff]
    %v1713 = vld [vmem:[#allocation5 + $0x58] sm:$0xff]
    %v1714 = vld [vmem:[#allocation5 + $0x60] sm:$0xff]
    %v1715 = vld [vmem:[#allocation5 + $0x68] sm:$0xff]
    %v1716 = vld [vmem:[#allocation5 + $0x70] sm:$0xff]
    %v1717 = vld [vmem:[#allocation5 + $0x78] sm:$0xff]
    %v1718 = vld [vmem:[%s7] sm:$0x1]
    %v1720 = vlaneseq
    %v1721 = vshrl.u32 %v1720, 7
    %v1722 = vsub.s32 0, %v1721
    %v1723 = vrot.slane %v1718, %v1722
    %1725 = vmatprep.subr.mxu0 0.0
    %1726 = vmatpush1.msra.mxu0 %v1702
    %1727 = vmatprep.subr.mxu0 0.0
    %1728 = vmatpush1.msra.mxu0 %v1703
    %1729 = vmatprep.subr.mxu0 0.0
    %1730 = vmatpush1.msra.mxu0 %v1704
    %1731 = vmatprep.subr.mxu0 0.0
    %1732 = vmatpush1.msra.mxu0 %v1705
    %1733 = vmatprep.subr.mxu0 0.0
    %1734 = vmatpush1.msra.mxu0 %v1706
    %1735 = vmatprep.subr.mxu0 0.0
    %1736 = vmatpush1.msra.mxu0 %v1707
    %1737 = vmatprep.subr.mxu0 0.0
    %1738 = vmatpush1.msra.mxu0 %v1708
    %1739 = vmatprep.subr.mxu0 0.0
    %1740 = vmatpush1.msra.mxu0 %v1709
    %1741 = vmatprep.subr.mxu0 0.0
    %1742 = vmatpush1.msra.mxu0 %v1710
    %1743 = vmatprep.subr.mxu0 0.0
    %1744 = vmatpush1.msra.mxu0 %v1711
    %1745 = vmatprep.subr.mxu0 0.0
    %1746 = vmatpush1.msra.mxu0 %v1712
    %1747 = vmatprep.subr.mxu0 0.0
    %1748 = vmatpush1.msra.mxu0 %v1713
    %1749 = vmatprep.subr.mxu0 0.0
    %1750 = vmatpush1.msra.mxu0 %v1714
    %1751 = vmatprep.subr.mxu0 0.0
    %1752 = vmatpush1.msra.mxu0 %v1715
    %1753 = vmatprep.subr.mxu0 0.0
    %1754 = vmatpush1.msra.mxu0 %v1716
    %1755 = vmatprep.subr.mxu0 0.0
    %1756 = vmatpush1.msra.mxu0 %v1717
    %1757 = vmatprep.subr.mxu0 0.0
    %1758 = vmatpush1.msra.mxu0 0.0
    %1759 = vmatprep.subr.mxu0 0.0
    %1760 = vmatpush1.msra.mxu0 0.0
    %1761 = vmatprep.subr.mxu0 0.0
    %1762 = vmatpush1.msra.mxu0 0.0
    %1763 = vmatprep.subr.mxu0 0.0
    %1764 = vmatpush1.msra.mxu0 0.0
    %1765 = vmatprep.subr.mxu0 0.0
    %1766 = vmatpush1.msra.mxu0 0.0
    %1767 = vmatprep.subr.mxu0 0.0
    %1768 = vmatpush1.msra.mxu0 0.0
    %1769 = vmatprep.subr.mxu0 0.0
    %1770 = vmatpush1.msra.mxu0 0.0
    %1771 = vmatprep.subr.mxu0 0.0
    %1772 = vmatpush1.msra.mxu0 0.0
    %1773 = vmatprep.subr.mxu0 0.0
    %1774 = vmatpush1.msra.mxu0 0.0
    %1775 = vmatprep.subr.mxu0 0.0
    %1776 = vmatpush1.msra.mxu0 0.0
    %1777 = vmatprep.subr.mxu0 0.0
    %1778 = vmatpush1.msra.mxu0 0.0
    %1779 = vmatprep.subr.mxu0 0.0
    %1780 = vmatpush1.msra.mxu0 0.0
    %1781 = vmatprep.subr.mxu0 0.0
    %1782 = vmatpush1.msra.mxu0 0.0
    %1783 = vmatprep.subr.mxu0 0.0
    %1784 = vmatpush1.msra.mxu0 0.0
    %1785 = vmatprep.subr.mxu0 0.0
    %1786 = vmatpush1.msra.mxu0 0.0
    %1787 = vmatprep.subr.mxu0 0.0
    %1788 = vmatpush1.msra.mxu0 0.0
    %1789 = vmatprep.mubr.f32.mxu0 0.0
    %1790 = vmatmul.mubr.f32.gmra.mrb[0].mxu0 %v1701
    %v1791 = vpop.f32.mrb[0].mxu0
    %v1792 = vadd.f32 %v1723, %v1791
    %v1793 = vpop.f32.mrb[0].mxu0
    %1794 = vdwg.mxu0
    %v1795 = vmax.f32 %v1792, 0.0
    %v1796 = vld [vmem:[#allocation7] sm:$0xff]
    %v1797 = vld [vmem:[#allocation7 + $0x8] sm:$0xff]
    %v1798 = vld [vmem:[#allocation7 + $0x10] sm:$0xff]
    %v1799 = vld [vmem:[#allocation7 + $0x18] sm:$0xff]
    %v1800 = vld [vmem:[#allocation7 + $0x20] sm:$0xff]
    %v1801 = vld [vmem:[#allocation7 + $0x28] sm:$0xff]
    %v1802 = vld [vmem:[#allocation7 + $0x30] sm:$0xff]
    %v1803 = vld [vmem:[#allocation7 + $0x38] sm:$0xff]
    %v1804 = vld [vmem:[#allocation7 + $0x40] sm:$0xff]
    %v1805 = vld [vmem:[#allocation7 + $0x48] sm:$0xff]
    %v1806 = vld [vmem:[#allocation7 + $0x50] sm:$0xff]
    %v1807 = vld [vmem:[#allocation7 + $0x58] sm:$0xff]
    %v1808 = vld [vmem:[#allocation7 + $0x60] sm:$0xff]
    %v1809 = vld [vmem:[#allocation7 + $0x68] sm:$0xff]
    %v1810 = vld [vmem:[#allocation7 + $0x70] sm:$0xff]
    %v1811 = vld [vmem:[#allocation7 + $0x78] sm:$0xff]
    %v1812 = vld [vmem:[#allocation7 + $0x80] sm:$0xff]
    %v1813 = vld [vmem:[#allocation7 + $0x88] sm:$0xff]
    %v1814 = vld [vmem:[#allocation7 + $0x90] sm:$0xff]
    %v1815 = vld [vmem:[#allocation7 + $0x98] sm:$0xff]
    %v1816 = vld [vmem:[#allocation7 + $0xa0] sm:$0xff]
    %v1817 = vld [vmem:[#allocation7 + $0xa8] sm:$0xff]
    %v1818 = vld [vmem:[#allocation7 + $0xb0] sm:$0xff]
    %v1819 = vld [vmem:[#allocation7 + $0xb8] sm:$0xff]
    %v1820 = vld [vmem:[#allocation7 + $0xc0] sm:$0xff]
    %v1821 = vld [vmem:[#allocation7 + $0xc8] sm:$0xff]
    %v1822 = vld [vmem:[#allocation7 + $0xd0] sm:$0xff]
    %v1823 = vld [vmem:[#allocation7 + $0xd8] sm:$0xff]
    %v1824 = vld [vmem:[#allocation7 + $0xe0] sm:$0xff]
    %v1825 = vld [vmem:[#allocation7 + $0xe8] sm:$0xff]
    %v1826 = vld [vmem:[#allocation7 + $0xf0] sm:$0xff]
    %v1827 = vld [vmem:[#allocation7 + $0xf8] sm:$0xff]
    %v1828 = vld [vmem:[%s7 + $0x1] sm:$0x3]
    %v1830 = vlaneseq
    %v1831 = vshrl.u32 %v1830, 7
    %v1832 = vsub.s32 0, %v1831
    %v1833 = vrot.slane %v1828, %v1832
    %v1834 = vlaneseq
    %v1835 = vshrl.u32 %v1834, 7
    %v1836 = vsub.s32 1, %v1835
    %v1837 = vrot.slane %v1828, %v1836
    %1840 = vmatprep.subr.mxu0 %v1797
    %1841 = vmatpush1.msra.mxu0 %v1796
    %1842 = vmatprep.subr.mxu0 %v1799
    %1843 = vmatpush1.msra.mxu0 %v1798
    %1844 = vmatprep.subr.mxu0 %v1801
    %1845 = vmatpush1.msra.mxu0 %v1800
    %1846 = vmatprep.subr.mxu0 %v1803
    %1847 = vmatpush1.msra.mxu0 %v1802
    %1848 = vmatprep.subr.mxu0 %v1805
    %1849 = vmatpush1.msra.mxu0 %v1804
    %1850 = vmatprep.subr.mxu0 %v1807
    %1851 = vmatpush1.msra.mxu0 %v1806
    %1852 = vmatprep.subr.mxu0 %v1809
    %1853 = vmatpush1.msra.mxu0 %v1808
    %1854 = vmatprep.subr.mxu0 %v1811
    %1855 = vmatpush1.msra.mxu0 %v1810
    %1856 = vmatprep.subr.mxu0 %v1813
    %1857 = vmatpush1.msra.mxu0 %v1812
    %1858 = vmatprep.subr.mxu0 %v1815
    %1859 = vmatpush1.msra.mxu0 %v1814
    %1860 = vmatprep.subr.mxu0 %v1817
    %1861 = vmatpush1.msra.mxu0 %v1816
    %1862 = vmatprep.subr.mxu0 %v1819
    %1863 = vmatpush1.msra.mxu0 %v1818
    %1864 = vmatprep.subr.mxu0 %v1821
    %1865 = vmatpush1.msra.mxu0 %v1820
    %1866 = vmatprep.subr.mxu0 %v1823
    %1867 = vmatpush1.msra.mxu0 %v1822
    %1868 = vmatprep.subr.mxu0 %v1825
    %1869 = vmatpush1.msra.mxu0 %v1824
    %1870 = vmatprep.subr.mxu0 %v1827
    %1871 = vmatpush1.msra.mxu0 %v1826
    %1872 = vmatprep.subr.mxu0 0.0
    %1873 = vmatpush1.msra.mxu0 0.0
    %1874 = vmatprep.subr.mxu0 0.0
    %1875 = vmatpush1.msra.mxu0 0.0
    %1876 = vmatprep.subr.mxu0 0.0
    %1877 = vmatpush1.msra.mxu0 0.0
    %1878 = vmatprep.subr.mxu0 0.0
    %1879 = vmatpush1.msra.mxu0 0.0
    %1880 = vmatprep.subr.mxu0 0.0
    %1881 = vmatpush1.msra.mxu0 0.0
    %1882 = vmatprep.subr.mxu0 0.0
    %1883 = vmatpush1.msra.mxu0 0.0
    %1884 = vmatprep.subr.mxu0 0.0
    %1885 = vmatpush1.msra.mxu0 0.0
    %1886 = vmatprep.subr.mxu0 0.0
    %1887 = vmatpush1.msra.mxu0 0.0
    %1888 = vmatprep.subr.mxu0 0.0
    %1889 = vmatpush1.msra.mxu0 0.0
    %1890 = vmatprep.subr.mxu0 0.0
    %1891 = vmatpush1.msra.mxu0 0.0
    %1892 = vmatprep.subr.mxu0 0.0
    %1893 = vmatpush1.msra.mxu0 0.0
    %1894 = vmatprep.subr.mxu0 0.0
    %1895 = vmatpush1.msra.mxu0 0.0
    %1896 = vmatprep.subr.mxu0 0.0
    %1897 = vmatpush1.msra.mxu0 0.0
    %1898 = vmatprep.subr.mxu0 0.0
    %1899 = vmatpush1.msra.mxu0 0.0
    %1900 = vmatprep.subr.mxu0 0.0
    %1901 = vmatpush1.msra.mxu0 0.0
    %1902 = vmatprep.subr.mxu0 0.0
    %1903 = vmatpush1.msra.mxu0 0.0
    %1904 = vmatprep.mubr.f32.mxu0 0.0
    %1905 = vmatmul.mubr.f32.gmra.mrb[0].mxu0 %v1795
    %v1906 = vpop.f32.mrb[0].mxu0
    %v1907 = vadd.f32 %v1833, %v1906
    %v1908 = vpop.f32.mrb[0].mxu0
    %v1909 = vadd.f32 %v1837, %v1908
    %1910 = vdwg.mxu0
    %v1911 = vxor.u32 %v1907, 2147483648
    %v1912 = vmul.f32 %v1911, 1.442695
    %v1913 = vpow.pop %v1912
    %v1914 = vadd.f32 %v1913, 1.0
    %v1915 = vrcp.pop %v1914
    %v1916 = vmul.f32 1.0, %v1915
    %v1917 = vmax.f32 %v1909, 0.0
    %v1918 = vand.u32 2147483647, %v1909
    %v1919 = vsub.f32 0.0, %v1918
    %v1920 = vmul.f32 %v1919, 1.442695
    %v1921 = vpow.pop %v1920
    %v1922 = vadd.f32 %v1921, 1.0
    %v1923 = vlog2.pop %v1922
    %v1924 = vmul.f32 %v1923, 0.6931472
    %v1925 = vadd.f32 %v1917, %v1924
    %v1926 = vadd.f32 %v1925, 0.01
    %v1927 = vmax.f32 %v1907, -15.942385
    %v1928 = vmin.f32 %v1927, 15.942385
    %v1929 = vld [vmem:[%s1] sm:$0xff]
    %v1930 = vmax.f32 %v1929, 1.1920929e-07
    %v1931 = vmin.f32 %v1930, 0.9999999
    %v1932 = vlog2.pop %v1931
    %v1933 = vmul.f32 %v1932, 0.6931472
    %v1934 = vsub.f32 1.0, %v1931
    %v1935 = vlog2.pop %v1934
    %v1936 = vmul.f32 %v1935, 0.6931472
    %v1937 = vsub.f32 %v1933, %v1936
    %v1938 = vadd.f32 %v1937, %v1928
    %v1939 = vrcp.pop %v1926
    %v1940 = vmul.f32 %v1938, %v1939
    %v1941 = vmul.f32 %v1940, 1.442695
    %v1942 = vpow.pop %v1941
    %v1943 = vxor.u32 %v1942, 2147483648
    %v1944 = vmul.f32 %v1943, 1.442695
    %v1945 = vpow.pop %v1944
    %v1946 = vadd.f32 %v1945, 1.0
    %v1947 = vrcp.pop %v1946
    %v1948 = vmul.f32 1.0, %v1947
    %vm1949 = vcmask 130048
    %1950 = vst.msk [vmem:[#allocation8] sm:$0xff] %vm1949, %v1948
    %s1951 = scalar_lea.vmem [#allocation8], 8
    %1952 = vst.msk [vmem:[%s1951] sm:$0xff] %vm1949, %v1916
    %s1953 = scalar_lea.vmem [#allocation8], 16
    %1954 = vst.msk [vmem:[%s1953] sm:$0xff] %vm1949, %v1926
    // Predicated region
    $region46: #{tpu_custom_call.1} parent=1 // pred_check
      _
    $region47: #{tpu_custom_call.1} parent=1 // pred_check_branch
      %1956 = sbr.rel (0) target = $region49
    $region48: #{tpu_custom_call.1} parent=1 // pred_region
      %s1958 = ssub.s32 384, 384
      %1959 = vsyncadd [#allocation4], %s1958
      %s1960 = sshll.u32 [#allocation8], 4
      %s1961 = int_to_ptr.vmem [resolvable:$true] %s1960
      %1966 = dma.vmem_to_hbm [thread:$0]  %s1961, 384, %s8, [#allocation4], 128, 128, 8
    $region49: #{tpu_custom_call.1} parent=1 // pred_fallthru
      _
    // Predicated region
    $region50: #{tpu_custom_call.1} parent=1 // pred_check
      _
    $region51: #{tpu_custom_call.1} parent=1 // pred_check_branch
      %1968 = sbr.rel (0) target = $region53
    $region52: #{tpu_custom_call.1} parent=1 // pred_region
      %1969 = dma.done [#allocation4], 384
    $region53: #{tpu_custom_call.1} parent=1 // pred_fallthru
      _
    %1970 = vsyncpa [#allocation3], 1
    %1971 = vsyncpa [#allocation6], 1
    %1972 = vsyncpa [#allocation4], 1

</llo_original>
